<compile_context>
chip_gen: v5e
topology: v5e:2x2
jax: 0.10.0
libtpu: 0.0.40
codegen_flags: <defaults>
</compile_context>

<pallas_src>
import functools

import jax
import jax.numpy as jnp
from jax import lax
from jax.experimental import pallas as pl
from jax.experimental.pallas import tpu as pltpu


# ----------------------------- in-kernel helpers -----------------------------

def _layer_norm_f32(x_f32, gamma, beta, eps=1e-5):
    # Matches torch LayerNorm forward in fp32 (biased variance).
    mu = jnp.mean(x_f32, axis=-1, keepdims=True)
    var = jnp.mean((x_f32 - mu) ** 2, axis=-1, keepdims=True)
    return (x_f32 - mu) * lax.rsqrt(var + eps) * gamma + beta


def _quick_gelu(x):
    return x * jax.nn.sigmoid(1.702 * x)


# ------------------------------ Pallas kernel --------------------------------

def transformer_kernel(x_ref,
                       ln1g_ref, ln1b_ref,
                       wq_ref, bq_ref, wk_ref, bk_ref, wv_ref, bv_ref,
                       wout_ref, bout_ref,
                       ln2g_ref, ln2b_ref,
                       wfc_ref, bfc_ref,
                       wproj_ref, bproj_ref,
                       o_ref,
                       x_scr,
                       *, n_head, compute_dtype):
    """One grid step = one ResidualAttentionBlock applied to one batch element.

    grid = (batch, layer).  The residual stream for the current batch element
    is carried across the layer axis in `x_scr` (fp32 VMEM scratch).
    """
    layer = pl.program_id(1)
    n_layers = pl.num_programs(1)

    @pl.when(layer == 0)
    def _init():
        x_scr[...] = x_ref[0].astype(jnp.float32)

    x = x_scr[...]                                   # (L, D) fp32 residual stream
    L, D = x.shape
    hd = D // n_head

    # ---------------- x = x + attn(ln_1(x)) ----------------
    h = _layer_norm_f32(x, ln1g_ref[0], ln1b_ref[0]).astype(compute_dtype)

    # 1/sqrt(hd) is pre-folded into wq/bq on the host.
    q = jnp.dot(h, wq_ref[0], preferred_element_type=jnp.float32) + bq_ref[0]
    k = jnp.dot(h, wk_ref[0], preferred_element_type=jnp.float32) + bk_ref[0]
    v = jnp.dot(h, wv_ref[0], preferred_element_type=jnp.float32) + bv_ref[0]

    # (L, D) -> (n_head, L, hd), heads batched on the MXU.
    q3 = jnp.transpose(q.reshape(L, n_head, hd), (1, 0, 2)).astype(compute_dtype)
    k3 = jnp.transpose(k.reshape(L, n_head, hd), (1, 0, 2)).astype(compute_dtype)
    v3 = jnp.transpose(v.reshape(L, n_head, hd), (1, 0, 2)).astype(compute_dtype)

    s = jnp.einsum('hqd,hkd->hqk', q3, k3,
                   preferred_element_type=jnp.float32)        # (n_head, L, L)
    s = s - jnp.max(s, axis=-1, keepdims=True)
    p = jnp.exp(s)
    p = p * pl.reciprocal(jnp.sum(p, axis=-1, keepdims=True), approx=True)

    attn = jnp.einsum('hqk,hkd->hqd', p.astype(compute_dtype), v3,
                      preferred_element_type=jnp.float32)     # (n_head, L, hd)
    attn = jnp.transpose(attn, (1, 0, 2)).reshape(L, D).astype(compute_dtype)
    attn = jnp.dot(attn, wout_ref[0],
                   preferred_element_type=jnp.float32) + bout_ref[0]
    x = x + attn

    # ---------------- x = x + mlp(ln_2(x)) ----------------
    h2 = _layer_norm_f32(x, ln2g_ref[0], ln2b_ref[0]).astype(compute_dtype)
    f = jnp.dot(h2, wfc_ref[0], preferred_element_type=jnp.float32) + bfc_ref[0]
    f = _quick_gelu(f).astype(compute_dtype)                  # (L, 4D)
    m = jnp.dot(f, wproj_ref[0],
                preferred_element_type=jnp.float32) + bproj_ref[0]
    x = x + m

    x_scr[...] = x

    @pl.when(layer == n_layers - 1)
    def _finalize():
        o_ref[0] = x.astype(o_ref.dtype)


# ------------------------------ host-side glue --------------------------------

_PARAM_ORDER = ("ln1_g", "ln1_b",
                "wq_t", "bq", "wk_t", "bk", "wv_t", "bv",
                "wout_t", "bout",
                "ln2_g", "ln2_b",
                "wfc_t", "bfc", "wproj_t", "bproj")


def _layer_spec(shape):
    # Per-layer parameter: leading dim is the layer index; DMA one layer's slab
    # per grid step (block index = current layer).
    trailing = (0,) * (len(shape) - 1)
    block = (1,) + tuple(shape[1:])
    return pl.BlockSpec(block, lambda b, l, t=trailing: (l,) + t)


def transformer_forward(x_lnd, packed_params, n_head):
    """Matches Transformer.forward: x (L, N, D) -> (L, N, D)."""
    L, N, D = x_lnd.shape
    x_nld = jnp.transpose(x_lnd, (1, 0, 2))          # (N, L, D) for the kernel
    num_layers = packed_params["wq_t"].shape[0]
    compute_dtype = packed_params["wq_t"].dtype

    ordered = [packed_params[name] for name in _PARAM_ORDER]
    in_specs = [pl.BlockSpec((1, L, D), lambda b, l: (b, 0, 0))]
    in_specs += [_layer_spec(p.shape) for p in ordered]

    kernel = functools.partial(transformer_kernel,
                               n_head=n_head, compute_dtype=compute_dtype)

    out_nld = pl.pallas_call(
        kernel,
        out_shape=jax.ShapeDtypeStruct((N, L, D), x_nld.dtype),
        grid_spec=pltpu.PrefetchScalarGridSpec(
            num_scalar_prefetch=0,
            grid=(N, num_layers),
            in_specs=in_specs,
            out_specs=pl.BlockSpec((1, L, D), lambda b, l: (b, 0, 0)),
            scratch_shapes=[pltpu.VMEM((L, D), jnp.float32)],
        ),
        compiler_params=pltpu.CompilerParams(
            dimension_semantics=("parallel", "arbitrary"),
            vmem_limit_bytes=64 * 1024 * 1024,
        ),
    )(x_nld, *ordered)

    return jnp.transpose(out_nld, (1, 0, 2))         # back to (L, N, D)


def init_layer_params(key, width):
    """Deterministic synthetic parameters in PyTorch layout:
    in_proj_weight (3D, D), out_proj (D, D), c_fc (4D, D), c_proj (D, 4D)."""
    D = width
    ks = jax.random.split(key, 6)
    s = 0.02
    return dict(
        ln1_g=jnp.ones((D,), jnp.float32),
        ln1_b=jnp.zeros((D,), jnp.float32),
        wqkv=jax.random.normal(ks[0], (3 * D, D), jnp.float32) * s,
        bqkv=jax.random.normal(ks[1], (3 * D,), jnp.float32) * s,
        wout=jax.random.normal(ks[2], (D, D), jnp.float32) * s,
        bout=jax.random.normal(ks[3], (D,), jnp.float32) * s,
        ln2_g=jnp.ones((D,), jnp.float32),
        ln2_b=jnp.zeros((D,), jnp.float32),
        wfc=jax.random.normal(ks[4], (4 * D, D), jnp.float32) * s,
        bfc=jax.random.normal(ks[5], (4 * D,), jnp.float32) * s,
        wproj=jax.random.normal(jax.random.fold_in(key, 7), (D, 4 * D), jnp.float32) * s,
        bproj=jax.random.normal(jax.random.fold_in(key, 8), (D,), jnp.float32) * s,
    )


def pack_params(layer_params, n_head, compute_dtype=jnp.bfloat16):
    """Stack per-layer params along a leading layer axis, split in_proj into
    separate Q/K/V matrices, pre-transpose to x@W layout, cast weights to the
    matmul compute dtype, and fold 1/sqrt(head_dim) into the Q projection."""
    D = layer_params[0]["wout"].shape[0]
    assert D % n_head == 0
    scale = 1.0 / float(D // n_head) ** 0.5

    def stack(fn):
        return jnp.stack([fn(p) for p in layer_params], axis=0)

    return dict(
        ln1_g=stack(lambda p: p["ln1_g"].reshape(1, D)),
        ln1_b=stack(lambda p: p["ln1_b"].reshape(1, D)),
        wq_t=stack(lambda p: (p["wqkv"][:D] * scale).T.astype(compute_dtype)),
        bq=stack(lambda p: (p["bqkv"][:D] * scale).reshape(1, D)),
        wk_t=stack(lambda p: p["wqkv"][D:2 * D].T.astype(compute_dtype)),
        bk=stack(lambda p: p["bqkv"][D:2 * D].reshape(1, D)),
        wv_t=stack(lambda p: p["wqkv"][2 * D:].T.astype(compute_dtype)),
        bv=stack(lambda p: p["bqkv"][2 * D:].reshape(1, D)),
        wout_t=stack(lambda p: p["wout"].T.astype(compute_dtype)),
        bout=stack(lambda p: p["bout"].reshape(1, D)),
        ln2_g=stack(lambda p: p["ln2_g"].reshape(1, D)),
        ln2_b=stack(lambda p: p["ln2_b"].reshape(1, D)),
        wfc_t=stack(lambda p: p["wfc"].T.astype(compute_dtype)),
        bfc=stack(lambda p: p["bfc"].reshape(1, 4 * D)),
        wproj_t=stack(lambda p: p["wproj"].T.astype(compute_dtype)),
        bproj=stack(lambda p: p["bproj"].reshape(1, D)),
    )


# ------------------------------ fp32 reference ---------------------------------

def _reference_forward(x_lnd, layer_params, n_head):
    """Pure-JAX fp32 reference matching the PyTorch module semantics."""
    x = x_lnd.astype(jnp.float32)
    L, N, D = x.shape
    hd = D // n_head
    scale = 1.0 / float(hd) ** 0.5

    def ln(y, g, b):
        mu = jnp.mean(y, -1, keepdims=True)
        var = jnp.mean((y - mu) ** 2, -1, keepdims=True)
        return (y - mu) * lax.rsqrt(var + 1e-5) * g + b

    for p in layer_params:
        h = ln(x, p["ln1_g"], p["ln1_b"])
        qkv = jnp.einsum('lnd,ed->lne', h, p["wqkv"]) + p["bqkv"]
        q, k, v = qkv[..., :D] * scale, qkv[..., D:2 * D], qkv[..., 2 * D:]
        qh = q.reshape(L, N, n_head, hd)
        kh = k.reshape(L, N, n_head, hd)
        vh = v.reshape(L, N, n_head, hd)
        s = jnp.einsum('qnhd,knhd->nhqk', qh, kh)
        pa = jax.nn.softmax(s, axis=-1)
        o = jnp.einsum('nhqk,knhd->qnhd', pa, vh).reshape(L, N, D)
        o = jnp.einsum('lnd,ed->lne', o, p["wout"]) + p["bout"]
        x = x + o
        h2 = ln(x, p["ln2_g"], p["ln2_b"])
        f = jnp.einsum('lnd,ed->lne', h2, p["wfc"]) + p["bfc"]
        f = f * jax.nn.sigmoid(1.702 * f)
        m = jnp.einsum('lnf,df->lnd', f, p["wproj"]) + p["bproj"]
        x = x + m
    return x


if __name__ == "__main__":
    # Small shapes: width=32, heads=4, layers=2, seq=8, batch=2.
    WIDTH, HEADS, LAYERS = 32, 4, 2
    L, N = 8, 2

    root = jax.random.PRNGKey(0)
    x_key, *layer_keys = jax.random.split(root, LAYERS + 1)

    x = jax.random.normal(x_key, (L, N, WIDTH), jnp.float32)   # (seq, batch, d_model)
    layer_params = [init_layer_params(k, WIDTH) for k in layer_keys]
    packed = pack_params(layer_params, HEADS, compute_dtype=jnp.bfloat16)

    out = transformer_forward(x, packed, HEADS)
    out = jax.block_until_ready(out)
    assert out.shape == (L, N, WIDTH)
    assert jnp.all(jnp.isfinite(out))

    # Loose tolerance: matmul operands are bf16 (fp32 accumulation), softmax
    # denominator uses the approximate EUP reciprocal.
    ref = _reference_forward(x, layer_params, HEADS)
    max_err = float(jnp.max(jnp.abs(out - ref)))
    assert max_err < 5e-2, f"max abs error vs fp32 reference: {max_err}"

    print("KERNEL_OK")
</pallas_src>

<mosaic_0001>
module attributes {stable_mosaic.version = 11 : i64} {
  func.func @transformer_kernel(%arg0: i32, %arg1: i32, %arg2: memref<1x8x32xf32, #tpu.memory_space<vmem>>, %arg3: memref<1x1x32xf32, #tpu.memory_space<vmem>>, %arg4: memref<1x1x32xf32, #tpu.memory_space<vmem>>, %arg5: memref<1x32x32xbf16, #tpu.memory_space<vmem>>, %arg6: memref<1x1x32xf32, #tpu.memory_space<vmem>>, %arg7: memref<1x32x32xbf16, #tpu.memory_space<vmem>>, %arg8: memref<1x1x32xf32, #tpu.memory_space<vmem>>, %arg9: memref<1x32x32xbf16, #tpu.memory_space<vmem>>, %arg10: memref<1x1x32xf32, #tpu.memory_space<vmem>>, %arg11: memref<1x32x32xbf16, #tpu.memory_space<vmem>>, %arg12: memref<1x1x32xf32, #tpu.memory_space<vmem>>, %arg13: memref<1x1x32xf32, #tpu.memory_space<vmem>>, %arg14: memref<1x1x32xf32, #tpu.memory_space<vmem>>, %arg15: memref<1x32x128xbf16, #tpu.memory_space<vmem>>, %arg16: memref<1x1x128xf32, #tpu.memory_space<vmem>>, %arg17: memref<1x128x32xbf16, #tpu.memory_space<vmem>>, %arg18: memref<1x1x32xf32, #tpu.memory_space<vmem>>, %arg19: memref<1x8x32xf32, #tpu.memory_space<vmem>>, %arg20: memref<8x32xf32, #tpu.memory_space<vmem>>) attributes {dimension_semantics = [#tpu.dimension_semantics<parallel>, #tpu.dimension_semantics<arbitrary>], iteration_bounds = array<i64: 2, 2>, scalar_prefetch = 0 : i64, scratch_operands = 1 : i64, tpu.core_type = #tpu.core_type<tc>, window_params = [{transform_indices = @transform_0, window_bounds = array<i64: 1, 8, 32>}, {transform_indices = @transform_1, window_bounds = array<i64: 1, 1, 32>}, {transform_indices = @transform_2, window_bounds = array<i64: 1, 1, 32>}, {transform_indices = @transform_3, window_bounds = array<i64: 1, 32, 32>}, {transform_indices = @transform_4, window_bounds = array<i64: 1, 1, 32>}, {transform_indices = @transform_5, window_bounds = array<i64: 1, 32, 32>}, {transform_indices = @transform_6, window_bounds = array<i64: 1, 1, 32>}, {transform_indices = @transform_7, window_bounds = array<i64: 1, 32, 32>}, {transform_indices = @transform_8, window_bounds = array<i64: 1, 1, 32>}, {transform_indices = @transform_9, window_bounds = array<i64: 1, 32, 32>}, {transform_indices = @transform_10, window_bounds = array<i64: 1, 1, 32>}, {transform_indices = @transform_11, window_bounds = array<i64: 1, 1, 32>}, {transform_indices = @transform_12, window_bounds = array<i64: 1, 1, 32>}, {transform_indices = @transform_13, window_bounds = array<i64: 1, 32, 128>}, {transform_indices = @transform_14, window_bounds = array<i64: 1, 1, 128>}, {transform_indices = @transform_15, window_bounds = array<i64: 1, 128, 32>}, {transform_indices = @transform_16, window_bounds = array<i64: 1, 1, 32>}, {transform_indices = @transform_17, window_bounds = array<i64: 1, 8, 32>}]} {
    %c0_i32 = arith.constant 0 : i32
    %0 = arith.cmpi eq, %arg1, %c0_i32 : i32
    %1 = arith.extui %0 : i1 to i32
    %c0_i32_0 = arith.constant 0 : i32
    %2 = arith.cmpi ne, %1, %c0_i32_0 : i32
    scf.if %2 {
      %c0_74 = arith.constant 0 : index
      %c0_75 = arith.constant 0 : index
      %c0_76 = arith.constant 0 : index
      %140 = vector.load %arg2[%c0_74, %c0_75, %c0_76] : memref<1x8x32xf32, #tpu.memory_space<vmem>>, vector<1x8x32xf32>
      %141 = vector.shape_cast %140 : vector<1x8x32xf32> to vector<8x32xf32>
      %c0_77 = arith.constant 0 : index
      %c0_78 = arith.constant 0 : index
      %142 = vector.load %arg20[%c0_77, %c0_78] : memref<8x32xf32, #tpu.memory_space<vmem>>, vector<8x32xf32>
      tpu.vector_store %arg20[%c0_77, %c0_78], %141 {strides = array<i32>} : memref<8x32xf32, #tpu.memory_space<vmem>>, vector<8x32xf32>,
    } else {
    }
    %c0 = arith.constant 0 : index
    %c0_1 = arith.constant 0 : index
    %3 = vector.load %arg20[%c0, %c0_1] : memref<8x32xf32, #tpu.memory_space<vmem>>, vector<8x32xf32>
    %c0_2 = arith.constant 0 : index
    %c0_3 = arith.constant 0 : index
    %c0_4 = arith.constant 0 : index
    %4 = vector.load %arg3[%c0_2, %c0_3, %c0_4] : memref<1x1x32xf32, #tpu.memory_space<vmem>>, vector<1x1x32xf32>
    %5 = vector.shape_cast %4 : vector<1x1x32xf32> to vector<1x32xf32>
    %c0_5 = arith.constant 0 : index
    %c0_6 = arith.constant 0 : index
    %c0_7 = arith.constant 0 : index
    %6 = vector.load %arg4[%c0_5, %c0_6, %c0_7] : memref<1x1x32xf32, #tpu.memory_space<vmem>>, vector<1x1x32xf32>
    %7 = vector.shape_cast %6 : vector<1x1x32xf32> to vector<1x32xf32>
    %cst = arith.constant dense<0.000000e+00> : vector<8xf32>
    %8 = vector.multi_reduction <add>, %3, %cst [1] : vector<8x32xf32> to vector<8xf32>
    %9 = vector.shape_cast %8 : vector<8xf32> to vector<8x1xf32>
    %cst_8 = arith.constant 3.200000e+01 : f32
    %10 = vector.broadcast %cst_8 : f32 to vector<8x1xf32>
    %11 = arith.divf %9, %10 : vector<8x1xf32>
    %12 = vector.broadcast %11 : vector<8x1xf32> to vector<8x32xf32>
    %13 = arith.subf %3, %12 : vector<8x32xf32>
    %14 = arith.mulf %13, %13 : vector<8x32xf32>
    %cst_9 = arith.constant dense<0.000000e+00> : vector<8xf32>
    %15 = vector.multi_reduction <add>, %14, %cst_9 [1] : vector<8x32xf32> to vector<8xf32>
    %16 = vector.shape_cast %15 : vector<8xf32> to vector<8x1xf32>
    %cst_10 = arith.constant 3.200000e+01 : f32
    %17 = vector.broadcast %cst_10 : f32 to vector<8x1xf32>
    %18 = arith.divf %16, %17 : vector<8x1xf32>
    %19 = vector.broadcast %11 : vector<8x1xf32> to vector<8x32xf32>
    %20 = arith.subf %3, %19 : vector<8x32xf32>
    %cst_11 = arith.constant 9.99999974E-6 : f32
    %21 = vector.broadcast %cst_11 : f32 to vector<8x1xf32>
    %22 = arith.addf %18, %21 : vector<8x1xf32>
    %23 = math.rsqrt %22 : vector<8x1xf32>
    %24 = vector.broadcast %23 : vector<8x1xf32> to vector<8x32xf32>
    %25 = arith.mulf %20, %24 : vector<8x32xf32>
    %26 = vector.broadcast %5 : vector<1x32xf32> to vector<8x32xf32>
    %27 = arith.mulf %25, %26 : vector<8x32xf32>
    %28 = vector.broadcast %7 : vector<1x32xf32> to vector<8x32xf32>
    %29 = arith.addf %27, %28 : vector<8x32xf32>
    %30 = arith.truncf %29 : vector<8x32xf32> to vector<8x32xbf16>
    %c0_12 = arith.constant 0 : index
    %c0_13 = arith.constant 0 : index
    %c0_14 = arith.constant 0 : index
    %31 = vector.load %arg5[%c0_12, %c0_13, %c0_14] : memref<1x32x32xbf16, #tpu.memory_space<vmem>>, vector<1x32x32xbf16>
    %32 = vector.shape_cast %31 : vector<1x32x32xbf16> to vector<32x32xbf16>
    %cst_15 = arith.constant dense<0.000000e+00> : vector<8x32xf32>
    %33 = tpu.matmul %30, %32, %cst_15 {dimension_numbers = #tpu.dot_dimension_numbers<[1], [0], [0], [1], [0, 0, 1, 1], [], []>} : vector<8x32xbf16>, vector<32x32xbf16>, vector<8x32xf32> -> vector<8x32xf32>
    %c0_16 = arith.constant 0 : index
    %c0_17 = arith.constant 0 : index
    %c0_18 = arith.constant 0 : index
    %34 = vector.load %arg6[%c0_16, %c0_17, %c0_18] : memref<1x1x32xf32, #tpu.memory_space<vmem>>, vector<1x1x32xf32>
    %35 = vector.shape_cast %34 : vector<1x1x32xf32> to vector<1x32xf32>
    %36 = vector.broadcast %35 : vector<1x32xf32> to vector<8x32xf32>
    %37 = arith.addf %33, %36 : vector<8x32xf32>
    %c0_19 = arith.constant 0 : index
    %c0_20 = arith.constant 0 : index
    %c0_21 = arith.constant 0 : index
    %38 = vector.load %arg7[%c0_19, %c0_20, %c0_21] : memref<1x32x32xbf16, #tpu.memory_space<vmem>>, vector<1x32x32xbf16>
    %39 = vector.shape_cast %38 : vector<1x32x32xbf16> to vector<32x32xbf16>
    %cst_22 = arith.constant dense<0.000000e+00> : vector<8x32xf32>
    %40 = tpu.matmul %30, %39, %cst_22 {dimension_numbers = #tpu.dot_dimension_numbers<[1], [0], [0], [1], [0, 0, 1, 1], [], []>} : vector<8x32xbf16>, vector<32x32xbf16>, vector<8x32xf32> -> vector<8x32xf32>
    %c0_23 = arith.constant 0 : index
    %c0_24 = arith.constant 0 : index
    %c0_25 = arith.constant 0 : index
    %41 = vector.load %arg8[%c0_23, %c0_24, %c0_25] : memref<1x1x32xf32, #tpu.memory_space<vmem>>, vector<1x1x32xf32>
    %42 = vector.shape_cast %41 : vector<1x1x32xf32> to vector<1x32xf32>
    %43 = vector.broadcast %42 : vector<1x32xf32> to vector<8x32xf32>
    %44 = arith.addf %40, %43 : vector<8x32xf32>
    %c0_26 = arith.constant 0 : index
    %c0_27 = arith.constant 0 : index
    %c0_28 = arith.constant 0 : index
    %45 = vector.load %arg9[%c0_26, %c0_27, %c0_28] : memref<1x32x32xbf16, #tpu.memory_space<vmem>>, vector<1x32x32xbf16>
    %46 = vector.shape_cast %45 : vector<1x32x32xbf16> to vector<32x32xbf16>
    %cst_29 = arith.constant dense<0.000000e+00> : vector<8x32xf32>
    %47 = tpu.matmul %30, %46, %cst_29 {dimension_numbers = #tpu.dot_dimension_numbers<[1], [0], [0], [1], [0, 0, 1, 1], [], []>} : vector<8x32xbf16>, vector<32x32xbf16>, vector<8x32xf32> -> vector<8x32xf32>
    %c0_30 = arith.constant 0 : index
    %c0_31 = arith.constant 0 : index
    %c0_32 = arith.constant 0 : index
    %48 = vector.load %arg10[%c0_30, %c0_31, %c0_32] : memref<1x1x32xf32, #tpu.memory_space<vmem>>, vector<1x1x32xf32>
    %49 = vector.shape_cast %48 : vector<1x1x32xf32> to vector<1x32xf32>
    %50 = vector.broadcast %49 : vector<1x32xf32> to vector<8x32xf32>
    %51 = arith.addf %47, %50 : vector<8x32xf32>
    %52 = vector.shape_cast %37 : vector<8x32xf32> to vector<8x4x8xf32>
    %53 = tpu.transpose %52, [1, 0, 2] : vector<8x4x8xf32> -> vector<4x8x8xf32>
    %54 = arith.truncf %53 : vector<4x8x8xf32> to vector<4x8x8xbf16>
    %55 = vector.shape_cast %44 : vector<8x32xf32> to vector<8x4x8xf32>
    %56 = tpu.transpose %55, [1, 0, 2] : vector<8x4x8xf32> -> vector<4x8x8xf32>
    %57 = arith.truncf %56 : vector<4x8x8xf32> to vector<4x8x8xbf16>
    %58 = vector.shape_cast %51 : vector<8x32xf32> to vector<8x4x8xf32>
    %59 = tpu.transpose %58, [1, 0, 2] : vector<8x4x8xf32> -> vector<4x8x8xf32>
    %60 = arith.truncf %59 : vector<4x8x8xf32> to vector<4x8x8xbf16>
    "tpu.trace_start"() <{level = 10 : i32, message = "hqd,hkd->hqk"}> : () -> ()
    %cst_33 = arith.constant dense<0.000000e+00> : vector<4x8x8xf32>
    %61 = tpu.matmul %54, %57, %cst_33 {dimension_numbers = #tpu.dot_dimension_numbers<[2], [2], [1], [1], [0, 0, 0, 1, 1, 1], [0], [0]>} : vector<4x8x8xbf16>, vector<4x8x8xbf16>, vector<4x8x8xf32> -> vector<4x8x8xf32>
    "tpu.trace_stop"() : () -> ()
    %cst_34 = arith.constant dense<0xFF800000> : vector<4x8xf32>
    %62 = vector.multi_reduction <maximumf>, %61, %cst_34 [2] : vector<4x8x8xf32> to vector<4x8xf32>
    %63 = vector.shape_cast %62 : vector<4x8xf32> to vector<4x8x1xf32>
    %64 = vector.broadcast %63 : vector<4x8x1xf32> to vector<4x8x8xf32>
    %65 = arith.subf %61, %64 : vector<4x8x8xf32>
    %66 = math.exp %65 : vector<4x8x8xf32>
    %cst_35 = arith.constant dense<0.000000e+00> : vector<4x8xf32>
    %67 = vector.multi_reduction <add>, %66, %cst_35 [2] : vector<4x8x8xf32> to vector<4x8xf32>
    %68 = vector.shape_cast %67 : vector<4x8xf32> to vector<4x8x1xf32>
    %69 = tpu.reciprocal %68 {approx = true} : vector<4x8x1xf32> -> vector<4x8x1xf32>
    %70 = vector.broadcast %69 : vector<4x8x1xf32> to vector<4x8x8xf32>
    %71 = arith.mulf %66, %70 : vector<4x8x8xf32>
    %72 = arith.truncf %71 : vector<4x8x8xf32> to vector<4x8x8xbf16>
    "tpu.trace_start"() <{level = 10 : i32, message = "hqk,hkd->hqd"}> : () -> ()
    %cst_36 = arith.constant dense<0.000000e+00> : vector<4x8x8xf32>
    %73 = tpu.matmul %72, %60, %cst_36 {dimension_numbers = #tpu.dot_dimension_numbers<[2], [1], [1], [2], [0, 0, 0, 1, 1, 2], [0], [0]>} : vector<4x8x8xbf16>, vector<4x8x8xbf16>, vector<4x8x8xf32> -> vector<4x8x8xf32>
    "tpu.trace_stop"() : () -> ()
    %74 = tpu.transpose %73, [1, 0, 2] : vector<4x8x8xf32> -> vector<8x4x8xf32>
    %75 = vector.shape_cast %74 : vector<8x4x8xf32> to vector<8x32xf32>
    %76 = arith.truncf %75 : vector<8x32xf32> to vector<8x32xbf16>
    %c0_37 = arith.constant 0 : index
    %c0_38 = arith.constant 0 : index
    %c0_39 = arith.constant 0 : index
    %77 = vector.load %arg11[%c0_37, %c0_38, %c0_39] : memref<1x32x32xbf16, #tpu.memory_space<vmem>>, vector<1x32x32xbf16>
    %78 = vector.shape_cast %77 : vector<1x32x32xbf16> to vector<32x32xbf16>
    %cst_40 = arith.constant dense<0.000000e+00> : vector<8x32xf32>
    %79 = tpu.matmul %76, %78, %cst_40 {dimension_numbers = #tpu.dot_dimension_numbers<[1], [0], [0], [1], [0, 0, 1, 1], [], []>} : vector<8x32xbf16>, vector<32x32xbf16>, vector<8x32xf32> -> vector<8x32xf32>
    %c0_41 = arith.constant 0 : index
    %c0_42 = arith.constant 0 : index
    %c0_43 = arith.constant 0 : index
    %80 = vector.load %arg12[%c0_41, %c0_42, %c0_43] : memref<1x1x32xf32, #tpu.memory_space<vmem>>, vector<1x1x32xf32>
    %81 = vector.shape_cast %80 : vector<1x1x32xf32> to vector<1x32xf32>
    %82 = vector.broadcast %81 : vector<1x32xf32> to vector<8x32xf32>
    %83 = arith.addf %79, %82 : vector<8x32xf32>
    %84 = arith.addf %3, %83 : vector<8x32xf32>
    %c0_44 = arith.constant 0 : index
    %c0_45 = arith.constant 0 : index
    %c0_46 = arith.constant 0 : index
    %85 = vector.load %arg13[%c0_44, %c0_45, %c0_46] : memref<1x1x32xf32, #tpu.memory_space<vmem>>, vector<1x1x32xf32>
    %86 = vector.shape_cast %85 : vector<1x1x32xf32> to vector<1x32xf32>
    %c0_47 = arith.constant 0 : index
    %c0_48 = arith.constant 0 : index
    %c0_49 = arith.constant 0 : index
    %87 = vector.load %arg14[%c0_47, %c0_48, %c0_49] : memref<1x1x32xf32, #tpu.memory_space<vmem>>, vector<1x1x32xf32>
    %88 = vector.shape_cast %87 : vector<1x1x32xf32> to vector<1x32xf32>
    %cst_50 = arith.constant dense<0.000000e+00> : vector<8xf32>
    %89 = vector.multi_reduction <add>, %84, %cst_50 [1] : vector<8x32xf32> to vector<8xf32>
    %90 = vector.shape_cast %89 : vector<8xf32> to vector<8x1xf32>
    %cst_51 = arith.constant 3.200000e+01 : f32
    %91 = vector.broadcast %cst_51 : f32 to vector<8x1xf32>
    %92 = arith.divf %90, %91 : vector<8x1xf32>
    %93 = vector.broadcast %92 : vector<8x1xf32> to vector<8x32xf32>
    %94 = arith.subf %84, %93 : vector<8x32xf32>
    %95 = arith.mulf %94, %94 : vector<8x32xf32>
    %cst_52 = arith.constant dense<0.000000e+00> : vector<8xf32>
    %96 = vector.multi_reduction <add>, %95, %cst_52 [1] : vector<8x32xf32> to vector<8xf32>
    %97 = vector.shape_cast %96 : vector<8xf32> to vector<8x1xf32>
    %cst_53 = arith.constant 3.200000e+01 : f32
    %98 = vector.broadcast %cst_53 : f32 to vector<8x1xf32>
    %99 = arith.divf %97, %98 : vector<8x1xf32>
    %100 = vector.broadcast %92 : vector<8x1xf32> to vector<8x32xf32>
    %101 = arith.subf %84, %100 : vector<8x32xf32>
    %cst_54 = arith.constant 9.99999974E-6 : f32
    %102 = vector.broadcast %cst_54 : f32 to vector<8x1xf32>
    %103 = arith.addf %99, %102 : vector<8x1xf32>
    %104 = math.rsqrt %103 : vector<8x1xf32>
    %105 = vector.broadcast %104 : vector<8x1xf32> to vector<8x32xf32>
    %106 = arith.mulf %101, %105 : vector<8x32xf32>
    %107 = vector.broadcast %86 : vector<1x32xf32> to vector<8x32xf32>
    %108 = arith.mulf %106, %107 : vector<8x32xf32>
    %109 = vector.broadcast %88 : vector<1x32xf32> to vector<8x32xf32>
    %110 = arith.addf %108, %109 : vector<8x32xf32>
    %111 = arith.truncf %110 : vector<8x32xf32> to vector<8x32xbf16>
    %c0_55 = arith.constant 0 : index
    %c0_56 = arith.constant 0 : index
    %c0_57 = arith.constant 0 : index
    %112 = vector.load %arg15[%c0_55, %c0_56, %c0_57] : memref<1x32x128xbf16, #tpu.memory_space<vmem>>, vector<1x32x128xbf16>
    %113 = vector.shape_cast %112 : vector<1x32x128xbf16> to vector<32x128xbf16>
    %cst_58 = arith.constant dense<0.000000e+00> : vector<8x128xf32>
    %114 = tpu.matmul %111, %113, %cst_58 {dimension_numbers = #tpu.dot_dimension_numbers<[1], [0], [0], [1], [0, 0, 1, 1], [], []>} : vector<8x32xbf16>, vector<32x128xbf16>, vector<8x128xf32> -> vector<8x128xf32>
    %c0_59 = arith.constant 0 : index
    %c0_60 = arith.constant 0 : index
    %c0_61 = arith.constant 0 : index
    %115 = vector.load %arg16[%c0_59, %c0_60, %c0_61] : memref<1x1x128xf32, #tpu.memory_space<vmem>>, vector<1x1x128xf32>
    %116 = vector.shape_cast %115 : vector<1x1x128xf32> to vector<1x128xf32>
    %117 = vector.broadcast %116 : vector<1x128xf32> to vector<8x128xf32>
    %118 = arith.addf %114, %117 : vector<8x128xf32>
    %cst_62 = arith.constant 1.702000e+00 : f32
    %119 = vector.broadcast %cst_62 : f32 to vector<8x128xf32>
    %120 = arith.mulf %119, %118 : vector<8x128xf32>
    %121 = arith.negf %120 : vector<8x128xf32>
    %122 = math.exp %121 : vector<8x128xf32>
    %cst_63 = arith.constant 1.000000e+00 : f32
    %123 = vector.broadcast %cst_63 : f32 to vector<8x128xf32>
    %124 = arith.addf %123, %122 : vector<8x128xf32>
    %125 = arith.divf %123, %124 : vector<8x128xf32>
    %126 = arith.mulf %118, %125 : vector<8x128xf32>
    %127 = arith.truncf %126 : vector<8x128xf32> to vector<8x128xbf16>
    %c0_64 = arith.constant 0 : index
    %c0_65 = arith.constant 0 : index
    %c0_66 = arith.constant 0 : index
    %128 = vector.load %arg17[%c0_64, %c0_65, %c0_66] : memref<1x128x32xbf16, #tpu.memory_space<vmem>>, vector<1x128x32xbf16>
    %129 = vector.shape_cast %128 : vector<1x128x32xbf16> to vector<128x32xbf16>
    %cst_67 = arith.constant dense<0.000000e+00> : vector<8x32xf32>
    %130 = tpu.matmul %127, %129, %cst_67 {dimension_numbers = #tpu.dot_dimension_numbers<[1], [0], [0], [1], [0, 0, 1, 1], [], []>} : vector<8x128xbf16>, vector<128x32xbf16>, vector<8x32xf32> -> vector<8x32xf32>
    %c0_68 = arith.constant 0 : index
    %c0_69 = arith.constant 0 : index
    %c0_70 = arith.constant 0 : index
    %131 = vector.load %arg18[%c0_68, %c0_69, %c0_70] : memref<1x1x32xf32, #tpu.memory_space<vmem>>, vector<1x1x32xf32>
    %132 = vector.shape_cast %131 : vector<1x1x32xf32> to vector<1x32xf32>
    %133 = vector.broadcast %132 : vector<1x32xf32> to vector<8x32xf32>
    %134 = arith.addf %130, %133 : vector<8x32xf32>
    %135 = arith.addf %84, %134 : vector<8x32xf32>
    %c0_71 = arith.constant 0 : index
    %c0_72 = arith.constant 0 : index
    %136 = vector.load %arg20[%c0_71, %c0_72] : memref<8x32xf32, #tpu.memory_space<vmem>>, vector<8x32xf32>
    tpu.vector_store %arg20[%c0_71, %c0_72], %135 {strides = array<i32>} : memref<8x32xf32, #tpu.memory_space<vmem>>, vector<8x32xf32>,
    %c1_i32 = arith.constant 1 : i32
    %137 = arith.cmpi eq, %arg1, %c1_i32 : i32
    %138 = arith.extui %137 : i1 to i32
    %c0_i32_73 = arith.constant 0 : i32
    %139 = arith.cmpi ne, %138, %c0_i32_73 : i32
    scf.if %139 {
      %c0_74 = arith.constant 0 : index
      %c0_75 = arith.constant 0 : index
      %c0_76 = arith.constant 0 : index
      %140 = vector.load %arg19[%c0_74, %c0_75, %c0_76] : memref<1x8x32xf32, #tpu.memory_space<vmem>>, vector<1x8x32xf32>
      %141 = vector.shape_cast %140 : vector<1x8x32xf32> to vector<8x32xf32>
      %142 = vector.shape_cast %135 : vector<8x32xf32> to vector<1x8x32xf32>
      tpu.vector_store %arg19[%c0_74, %c0_75, %c0_76], %142 {strides = array<i32>} : memref<1x8x32xf32, #tpu.memory_space<vmem>>, vector<1x8x32xf32>,
    } else {
    }
    return
  }
  func.func @transform_0(%arg0: i32, %arg1: i32) -> (i32, i32, i32) {
    %c0_i32 = arith.constant 0 : i32
    %c0_i32_0 = arith.constant 0 : i32
    %c0_i32_1 = arith.constant 0 : i32
    return %arg0, %c0_i32, %c0_i32_0 : i32, i32, i32
  }
  func.func @transform_1(%arg0: i32, %arg1: i32) -> (i32, i32, i32) {
    %c0_i32 = arith.constant 0 : i32
    %c0_i32_0 = arith.constant 0 : i32
    %c0_i32_1 = arith.constant 0 : i32
    return %arg1, %c0_i32, %c0_i32_0 : i32, i32, i32
  }
  func.func @transform_2(%arg0: i32, %arg1: i32) -> (i32, i32, i32) {
    %c0_i32 = arith.constant 0 : i32
    %c0_i32_0 = arith.constant 0 : i32
    %c0_i32_1 = arith.constant 0 : i32
    return %arg1, %c0_i32, %c0_i32_0 : i32, i32, i32
  }
  func.func @transform_3(%arg0: i32, %arg1: i32) -> (i32, i32, i32) {
    %c0_i32 = arith.constant 0 : i32
    %c0_i32_0 = arith.constant 0 : i32
    %c0_i32_1 = arith.constant 0 : i32
    return %arg1, %c0_i32, %c0_i32_0 : i32, i32, i32
  }
  func.func @transform_4(%arg0: i32, %arg1: i32) -> (i32, i32, i32) {
    %c0_i32 = arith.constant 0 : i32
    %c0_i32_0 = arith.constant 0 : i32
    %c0_i32_1 = arith.constant 0 : i32
    return %arg1, %c0_i32, %c0_i32_0 : i32, i32, i32
  }
  func.func @transform_5(%arg0: i32, %arg1: i32) -> (i32, i32, i32) {
    %c0_i32 = arith.constant 0 : i32
    %c0_i32_0 = arith.constant 0 : i32
    %c0_i32_1 = arith.constant 0 : i32
    return %arg1, %c0_i32, %c0_i32_0 : i32, i32, i32
  }
  func.func @transform_6(%arg0: i32, %arg1: i32) -> (i32, i32, i32) {
    %c0_i32 = arith.constant 0 : i32
    %c0_i32_0 = arith.constant 0 : i32
    %c0_i32_1 = arith.constant 0 : i32
    return %arg1, %c0_i32, %c0_i32_0 : i32, i32, i32
  }
  func.func @transform_7(%arg0: i32, %arg1: i32) -> (i32, i32, i32) {
    %c0_i32 = arith.constant 0 : i32
    %c0_i32_0 = arith.constant 0 : i32
    %c0_i32_1 = arith.constant 0 : i32
    return %arg1, %c0_i32, %c0_i32_0 : i32, i32, i32
  }
  func.func @transform_8(%arg0: i32, %arg1: i32) -> (i32, i32, i32) {
    %c0_i32 = arith.constant 0 : i32
    %c0_i32_0 = arith.constant 0 : i32
    %c0_i32_1 = arith.constant 0 : i32
    return %arg1, %c0_i32, %c0_i32_0 : i32, i32, i32
  }
  func.func @transform_9(%arg0: i32, %arg1: i32) -> (i32, i32, i32) {
    %c0_i32 = arith.constant 0 : i32
    %c0_i32_0 = arith.constant 0 : i32
    %c0_i32_1 = arith.constant 0 : i32
    return %arg1, %c0_i32, %c0_i32_0 : i32, i32, i32
  }
  func.func @transform_10(%arg0: i32, %arg1: i32) -> (i32, i32, i32) {
    %c0_i32 = arith.constant 0 : i32
    %c0_i32_0 = arith.constant 0 : i32
    %c0_i32_1 = arith.constant 0 : i32
    return %arg1, %c0_i32, %c0_i32_0 : i32, i32, i32
  }
  func.func @transform_11(%arg0: i32, %arg1: i32) -> (i32, i32, i32) {
    %c0_i32 = arith.constant 0 : i32
    %c0_i32_0 = arith.constant 0 : i32
    %c0_i32_1 = arith.constant 0 : i32
    return %arg1, %c0_i32, %c0_i32_0 : i32, i32, i32
  }
  func.func @transform_12(%arg0: i32, %arg1: i32) -> (i32, i32, i32) {
    %c0_i32 = arith.constant 0 : i32
    %c0_i32_0 = arith.constant 0 : i32
    %c0_i32_1 = arith.constant 0 : i32
    return %arg1, %c0_i32, %c0_i32_0 : i32, i32, i32
  }
  func.func @transform_13(%arg0: i32, %arg1: i32) -> (i32, i32, i32) {
    %c0_i32 = arith.constant 0 : i32
    %c0_i32_0 = arith.constant 0 : i32
    %c0_i32_1 = arith.constant 0 : i32
    return %arg1, %c0_i32, %c0_i32_0 : i32, i32, i32
  }
  func.func @transform_14(%arg0: i32, %arg1: i32) -> (i32, i32, i32) {
    %c0_i32 = arith.constant 0 : i32
    %c0_i32_0 = arith.constant 0 : i32
    %c0_i32_1 = arith.constant 0 : i32
    return %arg1, %c0_i32, %c0_i32_0 : i32, i32, i32
  }
  func.func @transform_15(%arg0: i32, %arg1: i32) -> (i32, i32, i32) {
    %c0_i32 = arith.constant 0 : i32
    %c0_i32_0 = arith.constant 0 : i32
    %c0_i32_1 = arith.constant 0 : i32
    return %arg1, %c0_i32, %c0_i32_0 : i32, i32, i32
  }
  func.func @transform_16(%arg0: i32, %arg1: i32) -> (i32, i32, i32) {
    %c0_i32 = arith.constant 0 : i32
    %c0_i32_0 = arith.constant 0 : i32
    %c0_i32_1 = arith.constant 0 : i32
    return %arg1, %c0_i32, %c0_i32_0 : i32, i32, i32
  }
  func.func @transform_17(%arg0: i32, %arg1: i32) -> (i32, i32, i32) {
    %c0_i32 = arith.constant 0 : i32
    %c0_i32_0 = arith.constant 0 : i32
    %c0_i32_1 = arith.constant 0 : i32
    return %arg0, %c0_i32, %c0_i32_0 : i32, i32, i32
  }
}

</mosaic_0001>

<llo_original>
// kernel: tpu_custom_call.1
$region0: #{tpu_custom_call.1}
  #allocation0 [shape = 'u32[]', space=smem, size = 0x4, offset = 0x4, fixed_abs, tag = 'smem constant byte address 0x4 - core index']
  #allocation1 [shape = 'u32[72,128]{1,0:T(1,128)}', space=vmem, size = 0x9000, scoped, tag = 'internal scratch']
  #allocation2 [shape = 'f32[8,32]{1,0:T(8,128)}', space=vmem, size = 0x1000, scoped, tag = 'scratch operand']
  %s0 = inlined_call_operand.hbm [shape: f32[2,8,32], index: 0, kind: input, shape index: {}]
  %s1 = inlined_call_operand.hbm [shape: f32[2,1,32], index: 1, kind: input, shape index: {}]
  %s2 = inlined_call_operand.hbm [shape: f32[2,1,32], index: 2, kind: input, shape index: {}]
  %s3 = inlined_call_operand.vmem [shape: bf16[2,32,32], index: 3, kind: input, shape index: {}]
  %s4 = inlined_call_operand.vmem [shape: f32[2,1,32], index: 4, kind: input, shape index: {}]
  %s5 = inlined_call_operand.vmem [shape: bf16[2,32,32], index: 5, kind: input, shape index: {}]
  %s6 = inlined_call_operand.vmem [shape: f32[2,1,32], index: 6, kind: input, shape index: {}]
  %s7 = inlined_call_operand.vmem [shape: bf16[2,32,32], index: 7, kind: input, shape index: {}]
  %s8 = inlined_call_operand.vmem [shape: f32[2,1,32], index: 8, kind: input, shape index: {}]
  %s9 = inlined_call_operand.vmem [shape: bf16[2,32,32], index: 9, kind: input, shape index: {}]
  %s10 = inlined_call_operand.vmem [shape: f32[2,1,32], index: 10, kind: input, shape index: {}]
  %s11 = inlined_call_operand.hbm [shape: f32[2,1,32], index: 11, kind: input, shape index: {}]
  %s12 = inlined_call_operand.vmem [shape: f32[2,1,32], index: 12, kind: input, shape index: {}]
  %s13 = inlined_call_operand.vmem [shape: bf16[2,32,128], index: 13, kind: input, shape index: {}]
  %s14 = inlined_call_operand.vmem [shape: f32[2,1,128], index: 14, kind: input, shape index: {}]
  %s15 = inlined_call_operand.vmem [shape: bf16[2,128,32], index: 15, kind: input, shape index: {}]
  %s16 = inlined_call_operand.vmem [shape: f32[2,1,32], index: 16, kind: input, shape index: {}]
  %s17 = inlined_call_operand.hbm [shape: f32[2,8,32], index: 17, kind: output, shape index: {}]
  %s18 = sld [smem:[#allocation0]]
  $region125: #{tpu_custom_call.1} parent=0
    _
  %s20 = ssub.s32 1, %s18
  %s21 = scalar_select 0, %s20, %s18
  $region1: #{tpu_custom_call.1} parent=0
    #allocation3 [shape = 'u8[8192]{0}', space=vmem, size = 0x2000, scoped, tag = 'input window, operand 0']
    #allocation4 [shape = 's32[2]{0}', space=sflag, size = 0x8, scoped, tag = 'scoped memory for tpu_custom_call.1']
    #allocation5 [shape = 's32[2]{0}', space=sflag, size = 0x8, scoped, tag = 'scoped memory for tpu_custom_call.1']
    #allocation6 [shape = 'u8[1024]{0}', space=vmem, size = 0x400, scoped, tag = 'input window, operand 1']
    #allocation7 [shape = 's32[2]{0}', space=sflag, size = 0x8, scoped, tag = 'scoped memory for tpu_custom_call.1']
    #allocation8 [shape = 'u8[1024]{0}', space=vmem, size = 0x400, scoped, tag = 'input window, operand 2']
    #allocation9 [shape = 'u8[1024]{0}', space=vmem, size = 0x400, scoped, tag = 'input window, operand 11']
    #allocation10 [shape = 's32[2]{0}', space=sflag, size = 0x8, scoped, tag = 'scoped memory for tpu_custom_call.1']
    #allocation11 [shape = 'u8[8192]{0}', space=vmem, size = 0x2000, scoped, tag = 'output window, operand 0']
    %22 = vsyncpa [#allocation4], 0
    %s23 = scalar_lea.sflag [#allocation4], 1
    %24 = vsyncpa %s23, 0
    %25 = vsyncpa [#allocation7], 0
    %s26 = scalar_lea.sflag [#allocation7], 1
    %27 = vsyncpa %s26, 0
    %28 = vsyncpa [#allocation10], 0
    %s29 = scalar_lea.sflag [#allocation10], 1
    %30 = vsyncpa %s29, 0
    %31 = vsyncpa [#allocation5], 0
    %s32 = scalar_lea.sflag [#allocation5], 1
    %33 = vsyncpa %s32, 0
    loop: start=0, step=1, limit=6
    $region2: #{tpu_custom_call.1} parent=1 // loop_pre_header
      _
    $region3: #{tpu_custom_call.1} parent=1 // loop_header
      %s35 = sphi 0, %s39
      %p36 = scmp.ge.s32.totalorder %s35, 6
      %s42 = sphi 0, %s54
      %s43 = sphi 0, %s50
      %s44 = sphi 0, %s42
      %s45 = sphi 0, %s43
      %s46 = sphi 0, %s44
      %s47 = sphi 0, %s45
      %s57 = sphi 0, %s59
      %s60 = sphi 0, %s57
      %s61 = sphi 0, %s60
      %s77 = sphi 0, %s61
      %s83 = sphi 0, %s85
      %s86 = sphi 0, %s83
      %s87 = sphi 0, %s86
      %s103 = sphi 0, %s87
      %s109 = sphi 0, %s111
      %s112 = sphi 0, %s109
      %s113 = sphi 0, %s112
      %s129 = sphi 0, %s113
      %s135 = sphi 0, %s137
      %s138 = sphi 0, %s135
      %s139 = sphi 0, %s138
      %s155 = sphi 0, %s139
      %s161 = sphi 0, %s163
      %s164 = sphi 0, %s161
      %s165 = sphi 0, %s164
      %s181 = sphi 0, %s165
      %s187 = sphi 0, %s189
      %s190 = sphi 0, %s187
      %s191 = sphi 0, %s190
      %s207 = sphi 0, %s191
      %s213 = sphi 0, %s215
      %s216 = sphi 0, %s213
      %s217 = sphi 0, %s216
      %s233 = sphi 0, %s217
      %s239 = sphi 0, %s241
      %s242 = sphi 0, %s239
      %s243 = sphi 0, %s242
      %s259 = sphi 0, %s243
      %s265 = sphi 0, %s267
      %s268 = sphi 0, %s265
      %s269 = sphi 0, %s268
      %s285 = sphi 0, %s269
      %s291 = sphi 0, %s293
      %s294 = sphi 0, %s291
      %s295 = sphi 0, %s294
      %s311 = sphi 0, %s295
      %s317 = sphi 0, %s319
      %s320 = sphi 0, %s317
      %s321 = sphi 0, %s320
      %s337 = sphi 0, %s321
      %s343 = sphi 0, %s345
      %s346 = sphi 0, %s343
      %s347 = sphi 0, %s346
      %s363 = sphi 0, %s347
      %s369 = sphi 0, %s371
      %s372 = sphi 0, %s369
      %s373 = sphi 0, %s372
      %s389 = sphi 0, %s373
      %s395 = sphi 0, %s397
      %s398 = sphi 0, %s395
      %s399 = sphi 0, %s398
      %s415 = sphi 0, %s399
      %s421 = sphi 0, %s423
      %s424 = sphi 0, %s421
      %s425 = sphi 0, %s424
      %s441 = sphi 0, %s425
      %s447 = sphi 0, %s449
      %s450 = sphi 0, %s447
      %s451 = sphi 0, %s450
      %s467 = sphi 0, %s451
      %s473 = sphi 0, %s475
      %s476 = sphi 0, %s473
      %s477 = sphi 0, %s476
      %s493 = sphi 0, %s477
      %s499 = sphi 0, %s501
      %s502 = sphi 0, %s499
      %s503 = sphi 0, %s502
      %s519 = sphi 0, %s503
    $region4: #{tpu_custom_call.1} parent=1 // loop_header_branch
      %38 = sbr.rel (%p36) target = $region8
    $region5: #{tpu_custom_call.1} parent=1 // loop_body
      %s40 = ssub.s32 %s35, 1
      %s41 = ssub.s32 %s35, 2
      %s48 = sadd.s32 1, %s43
      %p49 = scmp.ge.s32.totalorder %s48, 2
      %s50 = scalar_select %p49, 0, %s48
      %s51 = sadd.s32 1, %s42
      %s52 = scalar_select %p49, %s51, %s42
      %p53 = scmp.ge.s32.totalorder %s52, 2
      %s54 = scalar_select %p53, 0, %s52
      %s55 = ssub.s32 %s42, %s54
      %p56 = scmp.eq.s32.totalorder %s55, 0
      %s58 = sadd.s32 %s57, 1
      %s59 = scalar_select %p56, %s57, %s58
      %p62 = pneg %p56
      %p63 = scmp.eq.s32.totalorder %s35, 3
      %p64 = por %p62, %p63
      %p65 = scmp.ne.s32.totalorder %s57, %s60
      %p66 = scmp.eq.s32.totalorder %s35, 0
      %p67 = por %p65, %p66
      %p68 = scmp.ne.s32.totalorder %s57, %s60
      %p69 = scmp.eq.s32.totalorder %s40, 3
      %p70 = por %p68, %p69
      %p71 = scmp.ne.s32.totalorder %s60, %s61
      %p72 = scmp.eq.s32.totalorder %s40, 0
      %p73 = por %p71, %p72
      %p74 = scmp.ne.s32.totalorder %s60, %s61
      %p75 = scmp.eq.s32.totalorder %s41, 3
      %p76 = por %p74, %p75
      %p78 = scmp.ne.s32.totalorder %s61, %s77
      %p79 = scmp.eq.s32.totalorder %s41, 0
      %p80 = por %p78, %p79
      %s81 = ssub.s32 %s43, %s50
      %p82 = scmp.eq.s32.totalorder %s81, 0
      %s84 = sadd.s32 %s83, 1
      %s85 = scalar_select %p82, %s83, %s84
      %p88 = pneg %p82
      %p89 = scmp.eq.s32.totalorder %s35, 3
      %p90 = por %p88, %p89
      %p91 = scmp.ne.s32.totalorder %s83, %s86
      %p92 = scmp.eq.s32.totalorder %s35, 0
      %p93 = por %p91, %p92
      %p94 = scmp.ne.s32.totalorder %s83, %s86
      %p95 = scmp.eq.s32.totalorder %s40, 3
      %p96 = por %p94, %p95
      %p97 = scmp.ne.s32.totalorder %s86, %s87
      %p98 = scmp.eq.s32.totalorder %s40, 0
      %p99 = por %p97, %p98
      %p100 = scmp.ne.s32.totalorder %s86, %s87
      %p101 = scmp.eq.s32.totalorder %s41, 3
      %p102 = por %p100, %p101
      %p104 = scmp.ne.s32.totalorder %s87, %s103
      %p105 = scmp.eq.s32.totalorder %s41, 0
      %p106 = por %p104, %p105
      %s107 = ssub.s32 %s43, %s50
      %p108 = scmp.eq.s32.totalorder %s107, 0
      %s110 = sadd.s32 %s109, 1
      %s111 = scalar_select %p108, %s109, %s110
      %p114 = pneg %p108
      %p115 = scmp.eq.s32.totalorder %s35, 3
      %p116 = por %p114, %p115
      %p117 = scmp.ne.s32.totalorder %s109, %s112
      %p118 = scmp.eq.s32.totalorder %s35, 0
      %p119 = por %p117, %p118
      %p120 = scmp.ne.s32.totalorder %s109, %s112
      %p121 = scmp.eq.s32.totalorder %s40, 3
      %p122 = por %p120, %p121
      %p123 = scmp.ne.s32.totalorder %s112, %s113
      %p124 = scmp.eq.s32.totalorder %s40, 0
      %p125 = por %p123, %p124
      %p126 = scmp.ne.s32.totalorder %s112, %s113
      %p127 = scmp.eq.s32.totalorder %s41, 3
      %p128 = por %p126, %p127
      %p130 = scmp.ne.s32.totalorder %s113, %s129
      %p131 = scmp.eq.s32.totalorder %s41, 0
      %p132 = por %p130, %p131
      %s133 = ssub.s32 %s43, %s50
      %p134 = scmp.eq.s32.totalorder %s133, 0
      %s136 = sadd.s32 %s135, 1
      %s137 = scalar_select %p134, %s135, %s136
      %p140 = pneg %p134
      %p141 = scmp.eq.s32.totalorder %s35, 3
      %p142 = por %p140, %p141
      %p143 = scmp.ne.s32.totalorder %s135, %s138
      %p144 = scmp.eq.s32.totalorder %s35, 0
      %p145 = por %p143, %p144
      %p146 = scmp.ne.s32.totalorder %s135, %s138
      %p147 = scmp.eq.s32.totalorder %s40, 3
      %p148 = por %p146, %p147
      %p149 = scmp.ne.s32.totalorder %s138, %s139
      %p150 = scmp.eq.s32.totalorder %s40, 0
      %p151 = por %p149, %p150
      %p152 = scmp.ne.s32.totalorder %s138, %s139
      %p153 = scmp.eq.s32.totalorder %s41, 3
      %p154 = por %p152, %p153
      %p156 = scmp.ne.s32.totalorder %s139, %s155
      %p157 = scmp.eq.s32.totalorder %s41, 0
      %p158 = por %p156, %p157
      %s159 = ssub.s32 %s43, %s50
      %p160 = scmp.eq.s32.totalorder %s159, 0
      %s162 = sadd.s32 %s161, 1
      %s163 = scalar_select %p160, %s161, %s162
      %p166 = pneg %p160
      %p167 = scmp.eq.s32.totalorder %s35, 3
      %p168 = por %p166, %p167
      %p169 = scmp.ne.s32.totalorder %s161, %s164
      %p170 = scmp.eq.s32.totalorder %s35, 0
      %p171 = por %p169, %p170
      %p172 = scmp.ne.s32.totalorder %s161, %s164
      %p173 = scmp.eq.s32.totalorder %s40, 3
      %p174 = por %p172, %p173
      %p175 = scmp.ne.s32.totalorder %s164, %s165
      %p176 = scmp.eq.s32.totalorder %s40, 0
      %p177 = por %p175, %p176
      %p178 = scmp.ne.s32.totalorder %s164, %s165
      %p179 = scmp.eq.s32.totalorder %s41, 3
      %p180 = por %p178, %p179
      %p182 = scmp.ne.s32.totalorder %s165, %s181
      %p183 = scmp.eq.s32.totalorder %s41, 0
      %p184 = por %p182, %p183
      %s185 = ssub.s32 %s43, %s50
      %p186 = scmp.eq.s32.totalorder %s185, 0
      %s188 = sadd.s32 %s187, 1
      %s189 = scalar_select %p186, %s187, %s188
      %p192 = pneg %p186
      %p193 = scmp.eq.s32.totalorder %s35, 3
      %p194 = por %p192, %p193
      %p195 = scmp.ne.s32.totalorder %s187, %s190
      %p196 = scmp.eq.s32.totalorder %s35, 0
      %p197 = por %p195, %p196
      %p198 = scmp.ne.s32.totalorder %s187, %s190
      %p199 = scmp.eq.s32.totalorder %s40, 3
      %p200 = por %p198, %p199
      %p201 = scmp.ne.s32.totalorder %s190, %s191
      %p202 = scmp.eq.s32.totalorder %s40, 0
      %p203 = por %p201, %p202
      %p204 = scmp.ne.s32.totalorder %s190, %s191
      %p205 = scmp.eq.s32.totalorder %s41, 3
      %p206 = por %p204, %p205
      %p208 = scmp.ne.s32.totalorder %s191, %s207
      %p209 = scmp.eq.s32.totalorder %s41, 0
      %p210 = por %p208, %p209
      %s211 = ssub.s32 %s43, %s50
      %p212 = scmp.eq.s32.totalorder %s211, 0
      %s214 = sadd.s32 %s213, 1
      %s215 = scalar_select %p212, %s213, %s214
      %p218 = pneg %p212
      %p219 = scmp.eq.s32.totalorder %s35, 3
      %p220 = por %p218, %p219
      %p221 = scmp.ne.s32.totalorder %s213, %s216
      %p222 = scmp.eq.s32.totalorder %s35, 0
      %p223 = por %p221, %p222
      %p224 = scmp.ne.s32.totalorder %s213, %s216
      %p225 = scmp.eq.s32.totalorder %s40, 3
      %p226 = por %p224, %p225
      %p227 = scmp.ne.s32.totalorder %s216, %s217
      %p228 = scmp.eq.s32.totalorder %s40, 0
      %p229 = por %p227, %p228
      %p230 = scmp.ne.s32.totalorder %s216, %s217
      %p231 = scmp.eq.s32.totalorder %s41, 3
      %p232 = por %p230, %p231
      %p234 = scmp.ne.s32.totalorder %s217, %s233
      %p235 = scmp.eq.s32.totalorder %s41, 0
      %p236 = por %p234, %p235
      %s237 = ssub.s32 %s43, %s50
      %p238 = scmp.eq.s32.totalorder %s237, 0
      %s240 = sadd.s32 %s239, 1
      %s241 = scalar_select %p238, %s239, %s240
      %p244 = pneg %p238
      %p245 = scmp.eq.s32.totalorder %s35, 3
      %p246 = por %p244, %p245
      %p247 = scmp.ne.s32.totalorder %s239, %s242
      %p248 = scmp.eq.s32.totalorder %s35, 0
      %p249 = por %p247, %p248
      %p250 = scmp.ne.s32.totalorder %s239, %s242
      %p251 = scmp.eq.s32.totalorder %s40, 3
      %p252 = por %p250, %p251
      %p253 = scmp.ne.s32.totalorder %s242, %s243
      %p254 = scmp.eq.s32.totalorder %s40, 0
      %p255 = por %p253, %p254
      %p256 = scmp.ne.s32.totalorder %s242, %s243
      %p257 = scmp.eq.s32.totalorder %s41, 3
      %p258 = por %p256, %p257
      %p260 = scmp.ne.s32.totalorder %s243, %s259
      %p261 = scmp.eq.s32.totalorder %s41, 0
      %p262 = por %p260, %p261
      %s263 = ssub.s32 %s43, %s50
      %p264 = scmp.eq.s32.totalorder %s263, 0
      %s266 = sadd.s32 %s265, 1
      %s267 = scalar_select %p264, %s265, %s266
      %p270 = pneg %p264
      %p271 = scmp.eq.s32.totalorder %s35, 3
      %p272 = por %p270, %p271
      %p273 = scmp.ne.s32.totalorder %s265, %s268
      %p274 = scmp.eq.s32.totalorder %s35, 0
      %p275 = por %p273, %p274
      %p276 = scmp.ne.s32.totalorder %s265, %s268
      %p277 = scmp.eq.s32.totalorder %s40, 3
      %p278 = por %p276, %p277
      %p279 = scmp.ne.s32.totalorder %s268, %s269
      %p280 = scmp.eq.s32.totalorder %s40, 0
      %p281 = por %p279, %p280
      %p282 = scmp.ne.s32.totalorder %s268, %s269
      %p283 = scmp.eq.s32.totalorder %s41, 3
      %p284 = por %p282, %p283
      %p286 = scmp.ne.s32.totalorder %s269, %s285
      %p287 = scmp.eq.s32.totalorder %s41, 0
      %p288 = por %p286, %p287
      %s289 = ssub.s32 %s43, %s50
      %p290 = scmp.eq.s32.totalorder %s289, 0
      %s292 = sadd.s32 %s291, 1
      %s293 = scalar_select %p290, %s291, %s292
      %p296 = pneg %p290
      %p297 = scmp.eq.s32.totalorder %s35, 3
      %p298 = por %p296, %p297
      %p299 = scmp.ne.s32.totalorder %s291, %s294
      %p300 = scmp.eq.s32.totalorder %s35, 0
      %p301 = por %p299, %p300
      %p302 = scmp.ne.s32.totalorder %s291, %s294
      %p303 = scmp.eq.s32.totalorder %s40, 3
      %p304 = por %p302, %p303
      %p305 = scmp.ne.s32.totalorder %s294, %s295
      %p306 = scmp.eq.s32.totalorder %s40, 0
      %p307 = por %p305, %p306
      %p308 = scmp.ne.s32.totalorder %s294, %s295
      %p309 = scmp.eq.s32.totalorder %s41, 3
      %p310 = por %p308, %p309
      %p312 = scmp.ne.s32.totalorder %s295, %s311
      %p313 = scmp.eq.s32.totalorder %s41, 0
      %p314 = por %p312, %p313
      %s315 = ssub.s32 %s43, %s50
      %p316 = scmp.eq.s32.totalorder %s315, 0
      %s318 = sadd.s32 %s317, 1
      %s319 = scalar_select %p316, %s317, %s318
      %p322 = pneg %p316
      %p323 = scmp.eq.s32.totalorder %s35, 3
      %p324 = por %p322, %p323
      %p325 = scmp.ne.s32.totalorder %s317, %s320
      %p326 = scmp.eq.s32.totalorder %s35, 0
      %p327 = por %p325, %p326
      %p328 = scmp.ne.s32.totalorder %s317, %s320
      %p329 = scmp.eq.s32.totalorder %s40, 3
      %p330 = por %p328, %p329
      %p331 = scmp.ne.s32.totalorder %s320, %s321
      %p332 = scmp.eq.s32.totalorder %s40, 0
      %p333 = por %p331, %p332
      %p334 = scmp.ne.s32.totalorder %s320, %s321
      %p335 = scmp.eq.s32.totalorder %s41, 3
      %p336 = por %p334, %p335
      %p338 = scmp.ne.s32.totalorder %s321, %s337
      %p339 = scmp.eq.s32.totalorder %s41, 0
      %p340 = por %p338, %p339
      %s341 = ssub.s32 %s43, %s50
      %p342 = scmp.eq.s32.totalorder %s341, 0
      %s344 = sadd.s32 %s343, 1
      %s345 = scalar_select %p342, %s343, %s344
      %p348 = pneg %p342
      %p349 = scmp.eq.s32.totalorder %s35, 3
      %p350 = por %p348, %p349
      %p351 = scmp.ne.s32.totalorder %s343, %s346
      %p352 = scmp.eq.s32.totalorder %s35, 0
      %p353 = por %p351, %p352
      %p354 = scmp.ne.s32.totalorder %s343, %s346
      %p355 = scmp.eq.s32.totalorder %s40, 3
      %p356 = por %p354, %p355
      %p357 = scmp.ne.s32.totalorder %s346, %s347
      %p358 = scmp.eq.s32.totalorder %s40, 0
      %p359 = por %p357, %p358
      %p360 = scmp.ne.s32.totalorder %s346, %s347
      %p361 = scmp.eq.s32.totalorder %s41, 3
      %p362 = por %p360, %p361
      %p364 = scmp.ne.s32.totalorder %s347, %s363
      %p365 = scmp.eq.s32.totalorder %s41, 0
      %p366 = por %p364, %p365
      %s367 = ssub.s32 %s43, %s50
      %p368 = scmp.eq.s32.totalorder %s367, 0
      %s370 = sadd.s32 %s369, 1
      %s371 = scalar_select %p368, %s369, %s370
      %p374 = pneg %p368
      %p375 = scmp.eq.s32.totalorder %s35, 3
      %p376 = por %p374, %p375
      %p377 = scmp.ne.s32.totalorder %s369, %s372
      %p378 = scmp.eq.s32.totalorder %s35, 0
      %p379 = por %p377, %p378
      %p380 = scmp.ne.s32.totalorder %s369, %s372
      %p381 = scmp.eq.s32.totalorder %s40, 3
      %p382 = por %p380, %p381
      %p383 = scmp.ne.s32.totalorder %s372, %s373
      %p384 = scmp.eq.s32.totalorder %s40, 0
      %p385 = por %p383, %p384
      %p386 = scmp.ne.s32.totalorder %s372, %s373
      %p387 = scmp.eq.s32.totalorder %s41, 3
      %p388 = por %p386, %p387
      %p390 = scmp.ne.s32.totalorder %s373, %s389
      %p391 = scmp.eq.s32.totalorder %s41, 0
      %p392 = por %p390, %p391
      %s393 = ssub.s32 %s43, %s50
      %p394 = scmp.eq.s32.totalorder %s393, 0
      %s396 = sadd.s32 %s395, 1
      %s397 = scalar_select %p394, %s395, %s396
      %p400 = pneg %p394
      %p401 = scmp.eq.s32.totalorder %s35, 3
      %p402 = por %p400, %p401
      %p403 = scmp.ne.s32.totalorder %s395, %s398
      %p404 = scmp.eq.s32.totalorder %s35, 0
      %p405 = por %p403, %p404
      %p406 = scmp.ne.s32.totalorder %s395, %s398
      %p407 = scmp.eq.s32.totalorder %s40, 3
      %p408 = por %p406, %p407
      %p409 = scmp.ne.s32.totalorder %s398, %s399
      %p410 = scmp.eq.s32.totalorder %s40, 0
      %p411 = por %p409, %p410
      %p412 = scmp.ne.s32.totalorder %s398, %s399
      %p413 = scmp.eq.s32.totalorder %s41, 3
      %p414 = por %p412, %p413
      %p416 = scmp.ne.s32.totalorder %s399, %s415
      %p417 = scmp.eq.s32.totalorder %s41, 0
      %p418 = por %p416, %p417
      %s419 = ssub.s32 %s43, %s50
      %p420 = scmp.eq.s32.totalorder %s419, 0
      %s422 = sadd.s32 %s421, 1
      %s423 = scalar_select %p420, %s421, %s422
      %p426 = pneg %p420
      %p427 = scmp.eq.s32.totalorder %s35, 3
      %p428 = por %p426, %p427
      %p429 = scmp.ne.s32.totalorder %s421, %s424
      %p430 = scmp.eq.s32.totalorder %s35, 0
      %p431 = por %p429, %p430
      %p432 = scmp.ne.s32.totalorder %s421, %s424
      %p433 = scmp.eq.s32.totalorder %s40, 3
      %p434 = por %p432, %p433
      %p435 = scmp.ne.s32.totalorder %s424, %s425
      %p436 = scmp.eq.s32.totalorder %s40, 0
      %p437 = por %p435, %p436
      %p438 = scmp.ne.s32.totalorder %s424, %s425
      %p439 = scmp.eq.s32.totalorder %s41, 3
      %p440 = por %p438, %p439
      %p442 = scmp.ne.s32.totalorder %s425, %s441
      %p443 = scmp.eq.s32.totalorder %s41, 0
      %p444 = por %p442, %p443
      %s445 = ssub.s32 %s43, %s50
      %p446 = scmp.eq.s32.totalorder %s445, 0
      %s448 = sadd.s32 %s447, 1
      %s449 = scalar_select %p446, %s447, %s448
      %p452 = pneg %p446
      %p453 = scmp.eq.s32.totalorder %s35, 3
      %p454 = por %p452, %p453
      %p455 = scmp.ne.s32.totalorder %s447, %s450
      %p456 = scmp.eq.s32.totalorder %s35, 0
      %p457 = por %p455, %p456
      %p458 = scmp.ne.s32.totalorder %s447, %s450
      %p459 = scmp.eq.s32.totalorder %s40, 3
      %p460 = por %p458, %p459
      %p461 = scmp.ne.s32.totalorder %s450, %s451
      %p462 = scmp.eq.s32.totalorder %s40, 0
      %p463 = por %p461, %p462
      %p464 = scmp.ne.s32.totalorder %s450, %s451
      %p465 = scmp.eq.s32.totalorder %s41, 3
      %p466 = por %p464, %p465
      %p468 = scmp.ne.s32.totalorder %s451, %s467
      %p469 = scmp.eq.s32.totalorder %s41, 0
      %p470 = por %p468, %p469
      %s471 = ssub.s32 %s43, %s50
      %p472 = scmp.eq.s32.totalorder %s471, 0
      %s474 = sadd.s32 %s473, 1
      %s475 = scalar_select %p472, %s473, %s474
      %p478 = pneg %p472
      %p479 = scmp.eq.s32.totalorder %s35, 3
      %p480 = por %p478, %p479
      %p481 = scmp.ne.s32.totalorder %s473, %s476
      %p482 = scmp.eq.s32.totalorder %s35, 0
      %p483 = por %p481, %p482
      %p484 = scmp.ne.s32.totalorder %s473, %s476
      %p485 = scmp.eq.s32.totalorder %s40, 3
      %p486 = por %p484, %p485
      %p487 = scmp.ne.s32.totalorder %s476, %s477
      %p488 = scmp.eq.s32.totalorder %s40, 0
      %p489 = por %p487, %p488
      %p490 = scmp.ne.s32.totalorder %s476, %s477
      %p491 = scmp.eq.s32.totalorder %s41, 3
      %p492 = por %p490, %p491
      %p494 = scmp.ne.s32.totalorder %s477, %s493
      %p495 = scmp.eq.s32.totalorder %s41, 0
      %p496 = por %p494, %p495
      %s497 = ssub.s32 %s42, %s54
      %p498 = scmp.eq.s32.totalorder %s497, 0
      %s500 = sadd.s32 %s499, 1
      %s501 = scalar_select %p498, %s499, %s500
      %p504 = pneg %p498
      %p505 = scmp.eq.s32.totalorder %s35, 3
      %p506 = por %p504, %p505
      %p507 = scmp.ne.s32.totalorder %s499, %s502
      %p508 = scmp.eq.s32.totalorder %s35, 0
      %p509 = por %p507, %p508
      %p510 = scmp.ne.s32.totalorder %s499, %s502
      %p511 = scmp.eq.s32.totalorder %s40, 3
      %p512 = por %p510, %p511
      %p513 = scmp.ne.s32.totalorder %s502, %s503
      %p514 = scmp.eq.s32.totalorder %s40, 0
      %p515 = por %p513, %p514
      %p516 = scmp.ne.s32.totalorder %s502, %s503
      %p517 = scmp.eq.s32.totalorder %s41, 3
      %p518 = por %p516, %p517
      %p520 = scmp.ne.s32.totalorder %s503, %s519
      %p521 = scmp.eq.s32.totalorder %s41, 0
      %p522 = por %p520, %p521
      %p523 = scmp.le.s32.totalorder 1, %s35
      %p524 = scmp.lt.s32.totalorder %s35, 5
      %p525 = pnand %p523, %p524
      %p526 = pneg %p525
      // Predicated region
      $region9: #{tpu_custom_call.1} parent=5 // pred_check
        _
      $region10: #{tpu_custom_call.1} parent=5 // pred_check_branch
        %528 = sbr.rel (%p525) target = $region12
      $region11: #{tpu_custom_call.1} parent=5 // pred_region
        %s529 = ssub.s32 %s35, 1
      $region12: #{tpu_custom_call.1} parent=5 // pred_fallthru
        _
      %p530 = scmp.lt.s32.totalorder %s35, 4
      // Predicated region
      $region13: #{tpu_custom_call.1} parent=5 // pred_check
        %p531 = pneg %p530
      $region14: #{tpu_custom_call.1} parent=5 // pred_check_branch
        %533 = sbr.rel (%p531) target = $region16
      $region15: #{tpu_custom_call.1} parent=5 // pred_region
        // Predicated region
        $region17: #{tpu_custom_call.1} parent=15 // pred_check
          %p534 = pneg %p67
        $region18: #{tpu_custom_call.1} parent=15 // pred_check_branch
          %536 = sbr.rel (%p534) target = $region20
        $region19: #{tpu_custom_call.1} parent=15 // pred_region
          %s537 = sand.u32 %s57, 1
          %s538 = scalar_lea.sflag [#allocation4], %s537
          %s539 = sand.u32 %s57, 1
          %s540 = smul.addr %s539, 8
          %s541 = scalar_lea.vmem [#allocation3], %s540
          %543 = vsyncadd %s538, 0
          %s544 = smul.addr %s42, 8
          %s545 = scalar_lea.hbm %s0, %s544
          %s547 = sshll.u32 %s545, 4
          %s548 = int_to_ptr.hbm [resolvable:$true] %s547
          %s549 = sshll.u32 %s541, 4
          %s550 = int_to_ptr.vmem [resolvable:$true] %s549
          %552 = dma.hbm_to_vmem [thread:$0]  %s548, 128, %s550, %s538
        $region20: #{tpu_custom_call.1} parent=15 // pred_fallthru
          _
        // Predicated region
        $region21: #{tpu_custom_call.1} parent=15 // pred_check
          %p553 = pneg %p93
        $region22: #{tpu_custom_call.1} parent=15 // pred_check_branch
          %555 = sbr.rel (%p553) target = $region24
        $region23: #{tpu_custom_call.1} parent=15 // pred_region
          %s556 = sand.u32 %s35, 1
          %s557 = scalar_lea.sflag [#allocation7], %s556
          %s558 = sand.u32 %s83, 1
          %s559 = scalar_lea.vmem [#allocation6], %s558
          %561 = vsyncadd %s557, 0
          %s562 = scalar_lea.hbm %s1, %s43
          %s564 = sshll.u32 %s562, 4
          %s565 = int_to_ptr.hbm [resolvable:$true] %s564
          %s566 = sshll.u32 %s559, 4
          %s567 = int_to_ptr.vmem [resolvable:$true] %s566
          %569 = dma.hbm_to_vmem [thread:$0]  %s565, 16, %s567, %s557
        $region24: #{tpu_custom_call.1} parent=15 // pred_fallthru
          _
        // Predicated region
        $region25: #{tpu_custom_call.1} parent=15 // pred_check
          %p570 = pneg %p119
        $region26: #{tpu_custom_call.1} parent=15 // pred_check_branch
          %572 = sbr.rel (%p570) target = $region28
        $region27: #{tpu_custom_call.1} parent=15 // pred_region
          %s573 = sand.u32 %s35, 1
          %s574 = scalar_lea.sflag [#allocation7], %s573
          %s575 = sand.u32 %s109, 1
          %s576 = scalar_lea.vmem [#allocation8], %s575
          %578 = vsyncadd %s574, 0
          %s579 = scalar_lea.hbm %s2, %s43
          %s581 = sshll.u32 %s579, 4
          %s582 = int_to_ptr.hbm [resolvable:$true] %s581
          %s583 = sshll.u32 %s576, 4
          %s584 = int_to_ptr.vmem [resolvable:$true] %s583
          %586 = dma.hbm_to_vmem [thread:$0]  %s582, 16, %s584, %s574
        $region28: #{tpu_custom_call.1} parent=15 // pred_fallthru
          _
        // Predicated region
        $region29: #{tpu_custom_call.1} parent=15 // pred_check
          %p587 = pneg %p145
        $region30: #{tpu_custom_call.1} parent=15 // pred_check_branch
          %589 = sbr.rel (%p587) target = $region32
        $region31: #{tpu_custom_call.1} parent=15 // pred_region
          %p590 = scmp.lt.s32.totalorder %s43, 1
          %s591 = scalar_select %p590, %s43, 1
          %s592 = smul.addr %s591, 4
          %s593 = smul.addr %s592, 4
          %s594 = scalar_lea.vmem %s3, %s593
        $region32: #{tpu_custom_call.1} parent=15 // pred_fallthru
          _
        // Predicated region
        $region33: #{tpu_custom_call.1} parent=15 // pred_check
          %p595 = pneg %p171
        $region34: #{tpu_custom_call.1} parent=15 // pred_check_branch
          %597 = sbr.rel (%p595) target = $region36
        $region35: #{tpu_custom_call.1} parent=15 // pred_region
          %p598 = scmp.lt.s32.totalorder %s43, 1
          %s599 = scalar_select %p598, %s43, 1
          %s600 = scalar_lea.vmem %s4, %s599
        $region36: #{tpu_custom_call.1} parent=15 // pred_fallthru
          _
        // Predicated region
        $region37: #{tpu_custom_call.1} parent=15 // pred_check
          %p601 = pneg %p197
        $region38: #{tpu_custom_call.1} parent=15 // pred_check_branch
          %603 = sbr.rel (%p601) target = $region40
        $region39: #{tpu_custom_call.1} parent=15 // pred_region
          %p604 = scmp.lt.s32.totalorder %s43, 1
          %s605 = scalar_select %p604, %s43, 1
          %s606 = smul.addr %s605, 4
          %s607 = smul.addr %s606, 4
          %s608 = scalar_lea.vmem %s5, %s607
        $region40: #{tpu_custom_call.1} parent=15 // pred_fallthru
          _
        // Predicated region
        $region41: #{tpu_custom_call.1} parent=15 // pred_check
          %p609 = pneg %p223
        $region42: #{tpu_custom_call.1} parent=15 // pred_check_branch
          %611 = sbr.rel (%p609) target = $region44
        $region43: #{tpu_custom_call.1} parent=15 // pred_region
          %p612 = scmp.lt.s32.totalorder %s43, 1
          %s613 = scalar_select %p612, %s43, 1
          %s614 = scalar_lea.vmem %s6, %s613
        $region44: #{tpu_custom_call.1} parent=15 // pred_fallthru
          _
        // Predicated region
        $region45: #{tpu_custom_call.1} parent=15 // pred_check
          %p615 = pneg %p249
        $region46: #{tpu_custom_call.1} parent=15 // pred_check_branch
          %617 = sbr.rel (%p615) target = $region48
        $region47: #{tpu_custom_call.1} parent=15 // pred_region
          %p618 = scmp.lt.s32.totalorder %s43, 1
          %s619 = scalar_select %p618, %s43, 1
          %s620 = smul.addr %s619, 4
          %s621 = smul.addr %s620, 4
          %s622 = scalar_lea.vmem %s7, %s621
        $region48: #{tpu_custom_call.1} parent=15 // pred_fallthru
          _
        // Predicated region
        $region49: #{tpu_custom_call.1} parent=15 // pred_check
          %p623 = pneg %p275
        $region50: #{tpu_custom_call.1} parent=15 // pred_check_branch
          %625 = sbr.rel (%p623) target = $region52
        $region51: #{tpu_custom_call.1} parent=15 // pred_region
          %p626 = scmp.lt.s32.totalorder %s43, 1
          %s627 = scalar_select %p626, %s43, 1
          %s628 = scalar_lea.vmem %s8, %s627
        $region52: #{tpu_custom_call.1} parent=15 // pred_fallthru
          _
        // Predicated region
        $region53: #{tpu_custom_call.1} parent=15 // pred_check
          %p629 = pneg %p301
        $region54: #{tpu_custom_call.1} parent=15 // pred_check_branch
          %631 = sbr.rel (%p629) target = $region56
        $region55: #{tpu_custom_call.1} parent=15 // pred_region
          %p632 = scmp.lt.s32.totalorder %s43, 1
          %s633 = scalar_select %p632, %s43, 1
          %s634 = smul.addr %s633, 4
          %s635 = smul.addr %s634, 4
          %s636 = scalar_lea.vmem %s9, %s635
        $region56: #{tpu_custom_call.1} parent=15 // pred_fallthru
          _
        // Predicated region
        $region57: #{tpu_custom_call.1} parent=15 // pred_check
          %p637 = pneg %p327
        $region58: #{tpu_custom_call.1} parent=15 // pred_check_branch
          %639 = sbr.rel (%p637) target = $region60
        $region59: #{tpu_custom_call.1} parent=15 // pred_region
          %p640 = scmp.lt.s32.totalorder %s43, 1
          %s641 = scalar_select %p640, %s43, 1
          %s642 = scalar_lea.vmem %s10, %s641
        $region60: #{tpu_custom_call.1} parent=15 // pred_fallthru
          _
        // Predicated region
        $region61: #{tpu_custom_call.1} parent=15 // pred_check
          %p643 = pneg %p353
        $region62: #{tpu_custom_call.1} parent=15 // pred_check_branch
          %645 = sbr.rel (%p643) target = $region64
        $region63: #{tpu_custom_call.1} parent=15 // pred_region
          %s646 = sand.u32 %s343, 1
          %s647 = scalar_lea.sflag [#allocation10], %s646
          %s648 = sand.u32 %s343, 1
          %s649 = scalar_lea.vmem [#allocation9], %s648
          %651 = vsyncadd %s647, 0
          %s652 = scalar_lea.hbm %s11, %s43
          %s654 = sshll.u32 %s652, 4
          %s655 = int_to_ptr.hbm [resolvable:$true] %s654
          %s656 = sshll.u32 %s649, 4
          %s657 = int_to_ptr.vmem [resolvable:$true] %s656
          %659 = dma.hbm_to_vmem [thread:$0]  %s655, 16, %s657, %s647
        $region64: #{tpu_custom_call.1} parent=15 // pred_fallthru
          _
        // Predicated region
        $region65: #{tpu_custom_call.1} parent=15 // pred_check
          %p660 = pneg %p379
        $region66: #{tpu_custom_call.1} parent=15 // pred_check_branch
          %662 = sbr.rel (%p660) target = $region68
        $region67: #{tpu_custom_call.1} parent=15 // pred_region
          %p663 = scmp.lt.s32.totalorder %s43, 1
          %s664 = scalar_select %p663, %s43, 1
          %s665 = scalar_lea.vmem %s12, %s664
        $region68: #{tpu_custom_call.1} parent=15 // pred_fallthru
          _
        // Predicated region
        $region69: #{tpu_custom_call.1} parent=15 // pred_check
          %p666 = pneg %p405
        $region70: #{tpu_custom_call.1} parent=15 // pred_check_branch
          %668 = sbr.rel (%p666) target = $region72
        $region71: #{tpu_custom_call.1} parent=15 // pred_region
          %p669 = scmp.lt.s32.totalorder %s43, 1
          %s670 = scalar_select %p669, %s43, 1
          %s671 = smul.addr %s670, 4
          %s672 = smul.addr %s671, 4
          %s673 = scalar_lea.vmem %s13, %s672
        $region72: #{tpu_custom_call.1} parent=15 // pred_fallthru
          _
        // Predicated region
        $region73: #{tpu_custom_call.1} parent=15 // pred_check
          %p674 = pneg %p431
        $region74: #{tpu_custom_call.1} parent=15 // pred_check_branch
          %676 = sbr.rel (%p674) target = $region76
        $region75: #{tpu_custom_call.1} parent=15 // pred_region
          %p677 = scmp.lt.s32.totalorder %s43, 1
          %s678 = scalar_select %p677, %s43, 1
          %s679 = scalar_lea.vmem %s14, %s678
        $region76: #{tpu_custom_call.1} parent=15 // pred_fallthru
          _
        // Predicated region
        $region77: #{tpu_custom_call.1} parent=15 // pred_check
          %p680 = pneg %p457
        $region78: #{tpu_custom_call.1} parent=15 // pred_check_branch
          %682 = sbr.rel (%p680) target = $region80
        $region79: #{tpu_custom_call.1} parent=15 // pred_region
          %p683 = scmp.lt.s32.totalorder %s43, 1
          %s684 = scalar_select %p683, %s43, 1
          %s685 = smul.addr %s684, 16
          %s686 = smul.addr %s685, 4
          %s687 = scalar_lea.vmem %s15, %s686
        $region80: #{tpu_custom_call.1} parent=15 // pred_fallthru
          _
        // Predicated region
        $region81: #{tpu_custom_call.1} parent=15 // pred_check
          %p688 = pneg %p483
        $region82: #{tpu_custom_call.1} parent=15 // pred_check_branch
          %690 = sbr.rel (%p688) target = $region84
        $region83: #{tpu_custom_call.1} parent=15 // pred_region
          %p691 = scmp.lt.s32.totalorder %s43, 1
          %s692 = scalar_select %p691, %s43, 1
          %s693 = scalar_lea.vmem %s16, %s692
        $region84: #{tpu_custom_call.1} parent=15 // pred_fallthru
          _
      $region16: #{tpu_custom_call.1} parent=5 // pred_fallthru
        _
      %p694 = scmp.le.s32.totalorder 1, %s35
      %p695 = scmp.lt.s32.totalorder %s35, 5
      %p696 = pnand %p694, %p695
      %p697 = pneg %p696
      // Predicated region
      $region85: #{tpu_custom_call.1} parent=5 // pred_check
        _
      $region86: #{tpu_custom_call.1} parent=5 // pred_check_branch
        %699 = sbr.rel (%p696) target = $region88
      $region87: #{tpu_custom_call.1} parent=5 // pred_region
        %s700 = ssub.s32 %s35, 1
        %s701 = sand.u32 %s60, 1
        %s702 = scalar_lea.sflag [#allocation4], %s701
        %s703 = sand.u32 %s60, 1
        %s704 = smul.addr %s703, 8
        %s705 = scalar_lea.vmem [#allocation3], %s704
        // Predicated region
        $region89: #{tpu_custom_call.1} parent=87 // pred_check
          %p706 = pneg %p73
        $region90: #{tpu_custom_call.1} parent=87 // pred_check_branch
          %708 = sbr.rel (%p706) target = $region92
        $region91: #{tpu_custom_call.1} parent=87 // pred_region
          %710 = dma.done %s702, 128
        $region92: #{tpu_custom_call.1} parent=87 // pred_fallthru
          _
        %s711 = sand.u32 %s40, 1
        %s712 = scalar_lea.sflag [#allocation7], %s711
        %s713 = sand.u32 %s86, 1
        %s714 = scalar_lea.vmem [#allocation6], %s713
        // Predicated region
        $region93: #{tpu_custom_call.1} parent=87 // pred_check
          %p715 = pneg %p99
        $region94: #{tpu_custom_call.1} parent=87 // pred_check_branch
          %717 = sbr.rel (%p715) target = $region96
        $region95: #{tpu_custom_call.1} parent=87 // pred_region
          %719 = dma.done %s712, 16
        $region96: #{tpu_custom_call.1} parent=87 // pred_fallthru
          _
        %s720 = sand.u32 %s40, 1
        %s721 = scalar_lea.sflag [#allocation7], %s720
        %s722 = sand.u32 %s112, 1
        %s723 = scalar_lea.vmem [#allocation8], %s722
        // Predicated region
        $region97: #{tpu_custom_call.1} parent=87 // pred_check
          %p724 = pneg %p125
        $region98: #{tpu_custom_call.1} parent=87 // pred_check_branch
          %726 = sbr.rel (%p724) target = $region100
        $region99: #{tpu_custom_call.1} parent=87 // pred_region
          %728 = dma.done %s721, 16
        $region100: #{tpu_custom_call.1} parent=87 // pred_fallthru
          _
        %s729 = sand.u32 %s346, 1
        %s730 = scalar_lea.sflag [#allocation10], %s729
        %s731 = sand.u32 %s346, 1
        %s732 = scalar_lea.vmem [#allocation9], %s731
        // Predicated region
        $region101: #{tpu_custom_call.1} parent=87 // pred_check
          %p733 = pneg %p359
        $region102: #{tpu_custom_call.1} parent=87 // pred_check_branch
          %735 = sbr.rel (%p733) target = $region104
        $region103: #{tpu_custom_call.1} parent=87 // pred_region
          %737 = dma.done %s730, 16
        $region104: #{tpu_custom_call.1} parent=87 // pred_fallthru
          _
        %s738 = sand.u32 %s60, 1
        %s739 = scalar_lea.sflag [#allocation4], %s738
        %s740 = sand.u32 %s60, 1
        %s741 = smul.addr %s740, 8
        %s742 = scalar_lea.vmem [#allocation3], %s741
        %p743 = pneg %p73
        %p744 = pneg %p70
        %s745 = sand.u32 %s40, 1
        %s746 = scalar_lea.sflag [#allocation7], %s745
        %s747 = sand.u32 %s86, 1
        %s748 = scalar_lea.vmem [#allocation6], %s747
        %p749 = pneg %p99
        %p750 = pneg %p96
        %s751 = sand.u32 %s40, 1
        %s752 = scalar_lea.sflag [#allocation7], %s751
        %s753 = sand.u32 %s112, 1
        %s754 = scalar_lea.vmem [#allocation8], %s753
        %p755 = pneg %p125
        %p756 = pneg %p122
        %p757 = scmp.lt.s32.totalorder %s45, 1
        %s758 = scalar_select %p757, %s45, 1
        %s759 = smul.addr %s758, 4
        %s760 = smul.addr %s759, 4
        %s761 = scalar_lea.vmem %s3, %s760
        %p762 = pneg %p151
        %p763 = pneg %p148
        %p764 = scmp.lt.s32.totalorder %s45, 1
        %s765 = scalar_select %p764, %s45, 1
        %s766 = scalar_lea.vmem %s4, %s765
        %p767 = pneg %p177
        %p768 = pneg %p174
        %p769 = scmp.lt.s32.totalorder %s45, 1
        %s770 = scalar_select %p769, %s45, 1
        %s771 = smul.addr %s770, 4
        %s772 = smul.addr %s771, 4
        %s773 = scalar_lea.vmem %s5, %s772
        %p774 = pneg %p203
        %p775 = pneg %p200
        %p776 = scmp.lt.s32.totalorder %s45, 1
        %s777 = scalar_select %p776, %s45, 1
        %s778 = scalar_lea.vmem %s6, %s777
        %p779 = pneg %p229
        %p780 = pneg %p226
        %p781 = scmp.lt.s32.totalorder %s45, 1
        %s782 = scalar_select %p781, %s45, 1
        %s783 = smul.addr %s782, 4
        %s784 = smul.addr %s783, 4
        %s785 = scalar_lea.vmem %s7, %s784
        %p786 = pneg %p255
        %p787 = pneg %p252
        %p788 = scmp.lt.s32.totalorder %s45, 1
        %s789 = scalar_select %p788, %s45, 1
        %s790 = scalar_lea.vmem %s8, %s789
        %p791 = pneg %p281
        %p792 = pneg %p278
        %p793 = scmp.lt.s32.totalorder %s45, 1
        %s794 = scalar_select %p793, %s45, 1
        %s795 = smul.addr %s794, 4
        %s796 = smul.addr %s795, 4
        %s797 = scalar_lea.vmem %s9, %s796
        %p798 = pneg %p307
        %p799 = pneg %p304
        %p800 = scmp.lt.s32.totalorder %s45, 1
        %s801 = scalar_select %p800, %s45, 1
        %s802 = scalar_lea.vmem %s10, %s801
        %p803 = pneg %p333
        %p804 = pneg %p330
        %s805 = sand.u32 %s346, 1
        %s806 = scalar_lea.sflag [#allocation10], %s805
        %s807 = sand.u32 %s346, 1
        %s808 = scalar_lea.vmem [#allocation9], %s807
        %p809 = pneg %p359
        %p810 = pneg %p356
        %p811 = scmp.lt.s32.totalorder %s45, 1
        %s812 = scalar_select %p811, %s45, 1
        %s813 = scalar_lea.vmem %s12, %s812
        %p814 = pneg %p385
        %p815 = pneg %p382
        %p816 = scmp.lt.s32.totalorder %s45, 1
        %s817 = scalar_select %p816, %s45, 1
        %s818 = smul.addr %s817, 4
        %s819 = smul.addr %s818, 4
        %s820 = scalar_lea.vmem %s13, %s819
        %p821 = pneg %p411
        %p822 = pneg %p408
        %p823 = scmp.lt.s32.totalorder %s45, 1
        %s824 = scalar_select %p823, %s45, 1
        %s825 = scalar_lea.vmem %s14, %s824
        %p826 = pneg %p437
        %p827 = pneg %p434
        %p828 = scmp.lt.s32.totalorder %s45, 1
        %s829 = scalar_select %p828, %s45, 1
        %s830 = smul.addr %s829, 16
        %s831 = smul.addr %s830, 4
        %s832 = scalar_lea.vmem %s15, %s831
        %p833 = pneg %p463
        %p834 = pneg %p460
        %p835 = scmp.lt.s32.totalorder %s45, 1
        %s836 = scalar_select %p835, %s45, 1
        %s837 = scalar_lea.vmem %s16, %s836
        %p838 = pneg %p489
        %p839 = pneg %p486
        %p840 = pneg %p515
        %p841 = pneg %p512
        %s842 = sand.u32 %s502, 1
        %s843 = scalar_lea.sflag [#allocation5], %s842
        %s844 = sand.u32 %s502, 1
        %s845 = smul.addr %s844, 8
        %s846 = scalar_lea.vmem [#allocation11], %s845
        %p847 = scmp.lt.s32.totalorder %s45, 1
        %s848 = scalar_select %p847, %s45, 1
        %s849 = smul.addr %s848, 4
        %s850 = smul.addr %s849, 4
        %s851 = scalar_lea.vmem %s3, %s850
        %p852 = scmp.lt.s32.totalorder %s45, 1
        %s853 = scalar_select %p852, %s45, 1
        %s854 = scalar_lea.vmem %s4, %s853
        %p855 = scmp.lt.s32.totalorder %s45, 1
        %s856 = scalar_select %p855, %s45, 1
        %s857 = smul.addr %s856, 4
        %s858 = smul.addr %s857, 4
        %s859 = scalar_lea.vmem %s5, %s858
        %p860 = scmp.lt.s32.totalorder %s45, 1
        %s861 = scalar_select %p860, %s45, 1
        %s862 = scalar_lea.vmem %s6, %s861
        %p863 = scmp.lt.s32.totalorder %s45, 1
        %s864 = scalar_select %p863, %s45, 1
        %s865 = smul.addr %s864, 4
        %s866 = smul.addr %s865, 4
        %s867 = scalar_lea.vmem %s7, %s866
        %p868 = scmp.lt.s32.totalorder %s45, 1
        %s869 = scalar_select %p868, %s45, 1
        %s870 = scalar_lea.vmem %s8, %s869
        %p871 = scmp.lt.s32.totalorder %s45, 1
        %s872 = scalar_select %p871, %s45, 1
        %s873 = smul.addr %s872, 4
        %s874 = smul.addr %s873, 4
        %s875 = scalar_lea.vmem %s9, %s874
        %p876 = scmp.lt.s32.totalorder %s45, 1
        %s877 = scalar_select %p876, %s45, 1
        %s878 = scalar_lea.vmem %s10, %s877
        %p879 = scmp.lt.s32.totalorder %s45, 1
        %s880 = scalar_select %p879, %s45, 1
        %s881 = scalar_lea.vmem %s12, %s880
        %p882 = scmp.lt.s32.totalorder %s45, 1
        %s883 = scalar_select %p882, %s45, 1
        %s884 = smul.addr %s883, 4
        %s885 = smul.addr %s884, 4
        %s886 = scalar_lea.vmem %s13, %s885
        %p887 = scmp.lt.s32.totalorder %s45, 1
        %s888 = scalar_select %p887, %s45, 1
        %s889 = scalar_lea.vmem %s14, %s888
        %p890 = scmp.lt.s32.totalorder %s45, 1
        %s891 = scalar_select %p890, %s45, 1
        %s892 = smul.addr %s891, 16
        %s893 = smul.addr %s892, 4
        %s894 = scalar_lea.vmem %s15, %s893
        %p895 = scmp.lt.s32.totalorder %s45, 1
        %s896 = scalar_select %p895, %s45, 1
        %s897 = scalar_lea.vmem %s16, %s896
        %p899 = scmp.eq.s32.totalorder %s45, 0
        // Predicated region
        $region105: #{tpu_custom_call.1} parent=87 // pred_check
          %p900 = pneg %p899
        $region106: #{tpu_custom_call.1} parent=87 // pred_check_branch
          %902 = sbr.rel (%p900) target = $region108
        $region107: #{tpu_custom_call.1} parent=87 // pred_region
          %v903 = vld [vmem:[%s705] sm:$0xff]
          %vm904 = vcmask 261120
          %905 = vst.msk [vmem:[#allocation2] sm:$0xff] %vm904, %v903
        $region108: #{tpu_custom_call.1} parent=87 // pred_fallthru
          _
        %v906 = vld [vmem:[#allocation2] sm:$0xff]
        %v907 = vld [vmem:[%s714] sm:$0x1]
        %v908 = vld [vmem:[%s723] sm:$0x1]
        %vm909 = vcmask 261120
        %v910 = vsel %vm909, %v906, 0.0
        %911 = vadd.xlane.f32.xlu0 %v910
        %v912 = vpop.xlane.xlu0 %911
        %v913 = vrcp.pop 32.0
        %v914 = vmul.f32 32.0, %v913
        %v915 = vsub.f32 1.0, %v914
        %v916 = vmul.f32 %v913, %v915
        %v917 = vadd.f32 %v913, %v916
        %vm918 = vweird.f32 %v913
        %v919 = vsel %vm918, %v913, %v917
        %v920 = vmul.f32 %v912, %v919
        %v921 = vsub.f32 %v906, %v920
        %v922 = vmul.f32 %v921, %v921
        %v923 = vsel %vm909, %v922, 0.0
        %924 = vadd.xlane.f32.xlu0 %v923
        %v925 = vpop.xlane.xlu0 %924
        %v926 = vmul.f32 %v925, %v919
        %v927 = vadd.f32 %v926, 1e-05
        %v928 = vrsqrt.pop %v927
        %v929 = vmul.f32 %v928, %v927
        %v930 = vmul.f32 %v929, %v928
        %v931 = vmul.f32 0.5, %v930
        %v932 = vsub.f32 1.5, %v931
        %v933 = vmul.f32 %v928, %v932
        %vm934 = vweird.f32 %v927
        %vm935 = vweird.f32 %v928
        %vm936 = vmor %vm934, %vm935
        %v937 = vsel %vm936, %v928, %v933
        %v938 = vmul.f32 %v921, %v937
        %v940 = vperm.slane %v907, 0
        %v942 = vmul.f32 %v938, %v940
        %v944 = vperm.slane %v908, 0
        %v946 = vadd.f32 %v942, %v944
        %v947 = vpack.c.bf16 %v946, %v946
        %v948 = vld [vmem:[%s851] sm:$0xf]
        %v949 = vld [vmem:[%s851 + $0x4] sm:$0xf]
        %v950 = vld [vmem:[%s851 + $0x8] sm:$0xf]
        %v951 = vld [vmem:[%s851 + $0xc] sm:$0xf]
        %v952 = vld [vmem:[%s854] sm:$0x1]
        %v954 = vperm.slane %v952, 0
        %v960 = vunpack.c.l.b16 %v948
        %v961 = vunpack.c.l.b16 %v949
        %v962 = vunpack.c.l.b16 %v950
        %v963 = vunpack.c.l.b16 %v951
        %v964 = vpack.c.b16 %v961, %v960
        %v965 = vpack.c.b16 %v963, %v962
        %v969 = vsel %vm909, %v947, 0
        %971 = vmatpush.bf16.msra.mxu0 0
        %972 = vmatpush.bf16.msra.mxu0 0
        %973 = vmatpush.bf16.msra.mxu0 0
        %974 = vmatpush.bf16.msra.mxu0 0
        %975 = vmatpush.bf16.msra.mxu0 0
        %976 = vmatpush.bf16.msra.mxu0 0
        %977 = vmatpush.bf16.msra.mxu0 %v965
        %978 = vmatpush.bf16.msra.mxu0 %v964
        %979 = vmatmul.bf16.gmra.mxu0 %v969
        %v980 = vpop.f32.mrf.mxu0
        %v981 = vadd.f32 %v954, %v980
        %v982 = vpop.f32.mrf.mxu0
        %983 = vdwg.mxu0
        %v984 = vld [vmem:[%s859] sm:$0xf]
        %v985 = vld [vmem:[%s859 + $0x4] sm:$0xf]
        %v986 = vld [vmem:[%s859 + $0x8] sm:$0xf]
        %v987 = vld [vmem:[%s859 + $0xc] sm:$0xf]
        %v988 = vld [vmem:[%s862] sm:$0x1]
        %v990 = vperm.slane %v988, 0
        %v996 = vunpack.c.l.b16 %v984
        %v997 = vunpack.c.l.b16 %v985
        %v998 = vunpack.c.l.b16 %v986
        %v999 = vunpack.c.l.b16 %v987
        %v1000 = vpack.c.b16 %v997, %v996
        %v1001 = vpack.c.b16 %v999, %v998
        %1004 = vmatpush.bf16.msra.mxu0 0
        %1005 = vmatpush.bf16.msra.mxu0 0
        %1006 = vmatpush.bf16.msra.mxu0 0
        %1007 = vmatpush.bf16.msra.mxu0 0
        %1008 = vmatpush.bf16.msra.mxu0 0
        %1009 = vmatpush.bf16.msra.mxu0 0
        %1010 = vmatpush.bf16.msra.mxu0 %v1001
        %1011 = vmatpush.bf16.msra.mxu0 %v1000
        %1012 = vmatmul.bf16.gmra.mxu0 %v969
        %v1013 = vpop.f32.mrf.mxu0
        %v1014 = vadd.f32 %v990, %v1013
        %v1015 = vpop.f32.mrf.mxu0
        %1016 = vdwg.mxu0
        %v1017 = vld [vmem:[%s867] sm:$0xf]
        %v1018 = vld [vmem:[%s867 + $0x4] sm:$0xf]
        %v1019 = vld [vmem:[%s867 + $0x8] sm:$0xf]
        %v1020 = vld [vmem:[%s867 + $0xc] sm:$0xf]
        %v1021 = vld [vmem:[%s870] sm:$0x1]
        %v1023 = vperm.slane %v1021, 0
        %v1029 = vunpack.c.l.b16 %v1017
        %v1030 = vunpack.c.l.b16 %v1018
        %v1031 = vunpack.c.l.b16 %v1019
        %v1032 = vunpack.c.l.b16 %v1020
        %v1033 = vpack.c.b16 %v1030, %v1029
        %v1034 = vpack.c.b16 %v1032, %v1031
        %1037 = vmatpush.bf16.msra.mxu0 0
        %1038 = vmatpush.bf16.msra.mxu0 0
        %1039 = vmatpush.bf16.msra.mxu0 0
        %1040 = vmatpush.bf16.msra.mxu0 0
        %1041 = vmatpush.bf16.msra.mxu0 0
        %1042 = vmatpush.bf16.msra.mxu0 0
        %1043 = vmatpush.bf16.msra.mxu0 %v1034
        %1044 = vmatpush.bf16.msra.mxu0 %v1033
        %1045 = vmatmul.bf16.gmra.mxu0 %v969
        %v1046 = vpop.f32.mrf.mxu0
        %v1047 = vadd.f32 %v1023, %v1046
        %v1048 = vpop.f32.mrf.mxu0
        %1049 = vdwg.mxu0
        %1051 = vrot.lane.b32.xlu0 %v981, 120
        %v1052 = vpop.permute.xlu0 %1051
        %1054 = vrot.lane.b32.xlu0 %v981, 112
        %v1055 = vpop.permute.xlu0 %1054
        %1057 = vrot.lane.b32.xlu0 %v981, 104
        %v1058 = vpop.permute.xlu0 %1057
        %v1060 = vrot.slane %v1055, 4
        %vm1061 = vcmask 1047556
        %v1062 = vsel %vm1061, %v1060, %v981
        %v1063 = vrot.slane %v981, 4
        %v1064 = vsel %vm1061, %v1055, %v1063
        %v1066 = vunpack.c.l.s4 1983009808
        %v1067 = vunpack.c.0.s8 %v1066
        %v1068 = vperm.slane %v1062, %v1067
        %v1070 = vunpack.c.l.s4 1983009808
        %v1071 = vunpack.c.0.s8 %v1070
        %v1072 = vperm.slane %v1064, %v1071
        %v1073 = vrot.slane %v1058, 4
        %v1074 = vsel %vm1061, %v1073, %v1052
        %v1075 = vrot.slane %v1052, 4
        %v1076 = vsel %vm1061, %v1058, %v1075
        %v1078 = vunpack.c.l.s4 1983009808
        %v1079 = vunpack.c.0.s8 %v1078
        %v1080 = vperm.slane %v1074, %v1079
        %v1082 = vunpack.c.l.s4 1983009808
        %v1083 = vunpack.c.0.s8 %v1082
        %v1084 = vperm.slane %v1076, %v1083
        %v1085 = vrot.slane %v1080, 4
        %v1086 = vsel %vm1061, %v1085, %v1068
        %v1087 = vrot.slane %v1068, 4
        %v1088 = vsel %vm1061, %v1080, %v1087
        %v1090 = vunpack.c.l.s4 1934713408
        %v1091 = vunpack.c.0.s8 %v1090
        %v1092 = vperm.slane %v1086, %v1091
        %v1094 = vunpack.c.l.s4 1934713408
        %v1095 = vunpack.c.0.s8 %v1094
        %v1096 = vperm.slane %v1088, %v1095
        %v1097 = vrot.slane %v1084, 4
        %v1098 = vsel %vm1061, %v1097, %v1072
        %v1099 = vrot.slane %v1072, 4
        %v1100 = vsel %vm1061, %v1084, %v1099
        %v1102 = vunpack.c.l.s4 1934713408
        %v1103 = vunpack.c.0.s8 %v1102
        %v1104 = vperm.slane %v1098, %v1103
        %v1106 = vunpack.c.l.s4 1934713408
        %v1107 = vunpack.c.0.s8 %v1106
        %v1108 = vperm.slane %v1100, %v1107
        %v1109 = vrot.slane %v1092, 4
        %v1110 = vsel %vm1061, 0.0, %v1109
        %v1111 = vrot.slane %v1096, 4
        %v1112 = vsel %vm1061, 0.0, %v1111
        %v1113 = vrot.slane %v1104, 4
        %v1114 = vsel %vm1061, 0.0, %v1113
        %v1115 = vrot.slane %v1108, 4
        %v1116 = vsel %vm1061, 0.0, %v1115
        %v1117 = vsel %vm1061, %v1111, %v1092
        %v1119 = vunpack.c.l.s4 1983009808
        %v1120 = vunpack.c.0.s8 %v1119
        %v1121 = vperm.slane %v1117, %v1120
        %v1122 = vrot.slane %v1112, 4
        %v1123 = vsel %vm1061, %v1122, %v1110
        %v1125 = vunpack.c.l.s4 1983009808
        %v1126 = vunpack.c.0.s8 %v1125
        %v1127 = vperm.slane %v1123, %v1126
        %v1128 = vsel %vm1061, %v1115, %v1104
        %v1130 = vunpack.c.l.s4 1983009808
        %v1131 = vunpack.c.0.s8 %v1130
        %v1132 = vperm.slane %v1128, %v1131
        %v1133 = vrot.slane %v1116, 4
        %v1134 = vsel %vm1061, %v1133, %v1114
        %v1136 = vunpack.c.l.s4 1983009808
        %v1137 = vunpack.c.0.s8 %v1136
        %v1138 = vperm.slane %v1134, %v1137
        %v1139 = vrot.slane %v1127, 4
        %v1140 = vsel %vm1061, %v1139, %v1121
        %v1141 = vrot.slane %v1121, 4
        %v1142 = vsel %vm1061, %v1127, %v1141
        %v1144 = vunpack.c.l.s4 1934713408
        %v1145 = vunpack.c.0.s8 %v1144
        %v1146 = vperm.slane %v1140, %v1145
        %v1148 = vunpack.c.l.s4 1934713408
        %v1149 = vunpack.c.0.s8 %v1148
        %v1150 = vperm.slane %v1142, %v1149
        %v1151 = vrot.slane %v1138, 4
        %v1152 = vsel %vm1061, %v1151, %v1132
        %v1153 = vrot.slane %v1132, 4
        %v1154 = vsel %vm1061, %v1138, %v1153
        %v1156 = vunpack.c.l.s4 1934713408
        %v1157 = vunpack.c.0.s8 %v1156
        %v1158 = vperm.slane %v1152, %v1157
        %v1160 = vunpack.c.l.s4 1934713408
        %v1161 = vunpack.c.0.s8 %v1160
        %v1162 = vperm.slane %v1154, %v1161
        %v1163 = vrot.slane %v1158, 4
        %v1164 = vsel %vm1061, %v1163, %v1146
        %v1165 = vrot.slane %v1146, 4
        %v1166 = vsel %vm1061, %v1158, %v1165
        %v1167 = vrot.slane %v1162, 4
        %v1168 = vsel %vm1061, %v1167, %v1150
        %v1169 = vrot.slane %v1150, 4
        %v1170 = vsel %vm1061, %v1162, %v1169
        %v1171 = vpack.c.bf16 %v1164, %v1164
        %v1172 = vpack.c.bf16 %v1166, %v1166
        %v1173 = vpack.c.bf16 %v1168, %v1168
        %v1174 = vpack.c.bf16 %v1170, %v1170
        %1176 = vrot.lane.b32.xlu0 %v1014, 120
        %v1177 = vpop.permute.xlu0 %1176
        %1179 = vrot.lane.b32.xlu0 %v1014, 112
        %v1180 = vpop.permute.xlu0 %1179
        %1182 = vrot.lane.b32.xlu0 %v1014, 104
        %v1183 = vpop.permute.xlu0 %1182
        %v1185 = vrot.slane %v1180, 4
        %v1186 = vsel %vm1061, %v1185, %v1014
        %v1187 = vrot.slane %v1014, 4
        %v1188 = vsel %vm1061, %v1180, %v1187
        %v1190 = vunpack.c.l.s4 1983009808
        %v1191 = vunpack.c.0.s8 %v1190
        %v1192 = vperm.slane %v1186, %v1191
        %v1194 = vunpack.c.l.s4 1983009808
        %v1195 = vunpack.c.0.s8 %v1194
        %v1196 = vperm.slane %v1188, %v1195
        %v1197 = vrot.slane %v1183, 4
        %v1198 = vsel %vm1061, %v1197, %v1177
        %v1199 = vrot.slane %v1177, 4
        %v1200 = vsel %vm1061, %v1183, %v1199
        %v1202 = vunpack.c.l.s4 1983009808
        %v1203 = vunpack.c.0.s8 %v1202
        %v1204 = vperm.slane %v1198, %v1203
        %v1206 = vunpack.c.l.s4 1983009808
        %v1207 = vunpack.c.0.s8 %v1206
        %v1208 = vperm.slane %v1200, %v1207
        %v1209 = vrot.slane %v1204, 4
        %v1210 = vsel %vm1061, %v1209, %v1192
        %v1211 = vrot.slane %v1192, 4
        %v1212 = vsel %vm1061, %v1204, %v1211
        %v1214 = vunpack.c.l.s4 1934713408
        %v1215 = vunpack.c.0.s8 %v1214
        %v1216 = vperm.slane %v1210, %v1215
        %v1218 = vunpack.c.l.s4 1934713408
        %v1219 = vunpack.c.0.s8 %v1218
        %v1220 = vperm.slane %v1212, %v1219
        %v1221 = vrot.slane %v1208, 4
        %v1222 = vsel %vm1061, %v1221, %v1196
        %v1223 = vrot.slane %v1196, 4
        %v1224 = vsel %vm1061, %v1208, %v1223
        %v1226 = vunpack.c.l.s4 1934713408
        %v1227 = vunpack.c.0.s8 %v1226
        %v1228 = vperm.slane %v1222, %v1227
        %v1230 = vunpack.c.l.s4 1934713408
        %v1231 = vunpack.c.0.s8 %v1230
        %v1232 = vperm.slane %v1224, %v1231
        %v1233 = vrot.slane %v1216, 4
        %v1234 = vsel %vm1061, 0.0, %v1233
        %v1235 = vrot.slane %v1220, 4
        %v1236 = vsel %vm1061, 0.0, %v1235
        %v1237 = vrot.slane %v1228, 4
        %v1238 = vsel %vm1061, 0.0, %v1237
        %v1239 = vrot.slane %v1232, 4
        %v1240 = vsel %vm1061, 0.0, %v1239
        %v1241 = vsel %vm1061, %v1235, %v1216
        %v1243 = vunpack.c.l.s4 1983009808
        %v1244 = vunpack.c.0.s8 %v1243
        %v1245 = vperm.slane %v1241, %v1244
        %v1246 = vrot.slane %v1236, 4
        %v1247 = vsel %vm1061, %v1246, %v1234
        %v1249 = vunpack.c.l.s4 1983009808
        %v1250 = vunpack.c.0.s8 %v1249
        %v1251 = vperm.slane %v1247, %v1250
        %v1252 = vsel %vm1061, %v1239, %v1228
        %v1254 = vunpack.c.l.s4 1983009808
        %v1255 = vunpack.c.0.s8 %v1254
        %v1256 = vperm.slane %v1252, %v1255
        %v1257 = vrot.slane %v1240, 4
        %v1258 = vsel %vm1061, %v1257, %v1238
        %v1260 = vunpack.c.l.s4 1983009808
        %v1261 = vunpack.c.0.s8 %v1260
        %v1262 = vperm.slane %v1258, %v1261
        %v1263 = vrot.slane %v1251, 4
        %v1264 = vsel %vm1061, %v1263, %v1245
        %v1265 = vrot.slane %v1245, 4
        %v1266 = vsel %vm1061, %v1251, %v1265
        %v1268 = vunpack.c.l.s4 1934713408
        %v1269 = vunpack.c.0.s8 %v1268
        %v1270 = vperm.slane %v1264, %v1269
        %v1272 = vunpack.c.l.s4 1934713408
        %v1273 = vunpack.c.0.s8 %v1272
        %v1274 = vperm.slane %v1266, %v1273
        %v1275 = vrot.slane %v1262, 4
        %v1276 = vsel %vm1061, %v1275, %v1256
        %v1277 = vrot.slane %v1256, 4
        %v1278 = vsel %vm1061, %v1262, %v1277
        %v1280 = vunpack.c.l.s4 1934713408
        %v1281 = vunpack.c.0.s8 %v1280
        %v1282 = vperm.slane %v1276, %v1281
        %v1284 = vunpack.c.l.s4 1934713408
        %v1285 = vunpack.c.0.s8 %v1284
        %v1286 = vperm.slane %v1278, %v1285
        %v1287 = vrot.slane %v1282, 4
        %v1288 = vsel %vm1061, %v1287, %v1270
        %v1289 = vrot.slane %v1270, 4
        %v1290 = vsel %vm1061, %v1282, %v1289
        %v1291 = vrot.slane %v1286, 4
        %v1292 = vsel %vm1061, %v1291, %v1274
        %v1293 = vrot.slane %v1274, 4
        %v1294 = vsel %vm1061, %v1286, %v1293
        %v1295 = vpack.c.bf16 %v1288, %v1288
        %v1296 = vpack.c.bf16 %v1290, %v1290
        %v1297 = vpack.c.bf16 %v1292, %v1292
        %v1298 = vpack.c.bf16 %v1294, %v1294
        %1300 = vrot.lane.b32.xlu0 %v1047, 120
        %v1301 = vpop.permute.xlu0 %1300
        %1303 = vrot.lane.b32.xlu0 %v1047, 112
        %v1304 = vpop.permute.xlu0 %1303
        %1306 = vrot.lane.b32.xlu0 %v1047, 104
        %v1307 = vpop.permute.xlu0 %1306
        %v1309 = vrot.slane %v1304, 4
        %v1310 = vsel %vm1061, %v1309, %v1047
        %v1311 = vrot.slane %v1047, 4
        %v1312 = vsel %vm1061, %v1304, %v1311
        %v1314 = vunpack.c.l.s4 1983009808
        %v1315 = vunpack.c.0.s8 %v1314
        %v1316 = vperm.slane %v1310, %v1315
        %v1318 = vunpack.c.l.s4 1983009808
        %v1319 = vunpack.c.0.s8 %v1318
        %v1320 = vperm.slane %v1312, %v1319
        %v1321 = vrot.slane %v1307, 4
        %v1322 = vsel %vm1061, %v1321, %v1301
        %v1323 = vrot.slane %v1301, 4
        %v1324 = vsel %vm1061, %v1307, %v1323
        %v1326 = vunpack.c.l.s4 1983009808
        %v1327 = vunpack.c.0.s8 %v1326
        %v1328 = vperm.slane %v1322, %v1327
        %v1330 = vunpack.c.l.s4 1983009808
        %v1331 = vunpack.c.0.s8 %v1330
        %v1332 = vperm.slane %v1324, %v1331
        %v1333 = vrot.slane %v1328, 4
        %v1334 = vsel %vm1061, %v1333, %v1316
        %v1335 = vrot.slane %v1316, 4
        %v1336 = vsel %vm1061, %v1328, %v1335
        %v1338 = vunpack.c.l.s4 1934713408
        %v1339 = vunpack.c.0.s8 %v1338
        %v1340 = vperm.slane %v1334, %v1339
        %v1342 = vunpack.c.l.s4 1934713408
        %v1343 = vunpack.c.0.s8 %v1342
        %v1344 = vperm.slane %v1336, %v1343
        %v1345 = vrot.slane %v1332, 4
        %v1346 = vsel %vm1061, %v1345, %v1320
        %v1347 = vrot.slane %v1320, 4
        %v1348 = vsel %vm1061, %v1332, %v1347
        %v1350 = vunpack.c.l.s4 1934713408
        %v1351 = vunpack.c.0.s8 %v1350
        %v1352 = vperm.slane %v1346, %v1351
        %v1354 = vunpack.c.l.s4 1934713408
        %v1355 = vunpack.c.0.s8 %v1354
        %v1356 = vperm.slane %v1348, %v1355
        %v1357 = vrot.slane %v1340, 4
        %v1358 = vsel %vm1061, 0.0, %v1357
        %v1359 = vrot.slane %v1344, 4
        %v1360 = vsel %vm1061, 0.0, %v1359
        %v1361 = vrot.slane %v1352, 4
        %v1362 = vsel %vm1061, 0.0, %v1361
        %v1363 = vrot.slane %v1356, 4
        %v1364 = vsel %vm1061, 0.0, %v1363
        %v1365 = vsel %vm1061, %v1359, %v1340
        %v1367 = vunpack.c.l.s4 1983009808
        %v1368 = vunpack.c.0.s8 %v1367
        %v1369 = vperm.slane %v1365, %v1368
        %v1370 = vrot.slane %v1360, 4
        %v1371 = vsel %vm1061, %v1370, %v1358
        %v1373 = vunpack.c.l.s4 1983009808
        %v1374 = vunpack.c.0.s8 %v1373
        %v1375 = vperm.slane %v1371, %v1374
        %v1376 = vsel %vm1061, %v1363, %v1352
        %v1378 = vunpack.c.l.s4 1983009808
        %v1379 = vunpack.c.0.s8 %v1378
        %v1380 = vperm.slane %v1376, %v1379
        %v1381 = vrot.slane %v1364, 4
        %v1382 = vsel %vm1061, %v1381, %v1362
        %v1384 = vunpack.c.l.s4 1983009808
        %v1385 = vunpack.c.0.s8 %v1384
        %v1386 = vperm.slane %v1382, %v1385
        %v1387 = vrot.slane %v1375, 4
        %v1388 = vsel %vm1061, %v1387, %v1369
        %v1389 = vrot.slane %v1369, 4
        %v1390 = vsel %vm1061, %v1375, %v1389
        %v1392 = vunpack.c.l.s4 1934713408
        %v1393 = vunpack.c.0.s8 %v1392
        %v1394 = vperm.slane %v1388, %v1393
        %v1396 = vunpack.c.l.s4 1934713408
        %v1397 = vunpack.c.0.s8 %v1396
        %v1398 = vperm.slane %v1390, %v1397
        %v1399 = vrot.slane %v1386, 4
        %v1400 = vsel %vm1061, %v1399, %v1380
        %v1401 = vrot.slane %v1380, 4
        %v1402 = vsel %vm1061, %v1386, %v1401
        %v1404 = vunpack.c.l.s4 1934713408
        %v1405 = vunpack.c.0.s8 %v1404
        %v1406 = vperm.slane %v1400, %v1405
        %v1408 = vunpack.c.l.s4 1934713408
        %v1409 = vunpack.c.0.s8 %v1408
        %v1410 = vperm.slane %v1402, %v1409
        %v1411 = vrot.slane %v1406, 4
        %v1412 = vsel %vm1061, %v1411, %v1394
        %v1413 = vrot.slane %v1394, 4
        %v1414 = vsel %vm1061, %v1406, %v1413
        %v1415 = vrot.slane %v1410, 4
        %v1416 = vsel %vm1061, %v1415, %v1398
        %v1417 = vrot.slane %v1398, 4
        %v1418 = vsel %vm1061, %v1410, %v1417
        %v1419 = vpack.c.bf16 %v1412, %v1412
        %v1420 = vpack.c.bf16 %v1414, %v1414
        %v1421 = vpack.c.bf16 %v1416, %v1416
        %v1422 = vpack.c.bf16 %v1418, %v1418
        %vm1423 = vcmask 64512
        %v1425 = vsel %vm1423, %v1171, 0
        %v1428 = vsel %vm1423, %v1295, 0
        %1430 = vmatpush.bf16.xpose.msra.mxu0 0
        %1431 = vmatpush.bf16.xpose.msra.mxu0 0
        %1432 = vmatpush.bf16.xpose.msra.mxu0 0
        %1433 = vmatpush.bf16.xpose.msra.mxu0 0
        %1434 = vmatpush.bf16.xpose.msra.mxu0 0
        %1435 = vmatpush.bf16.xpose.msra.mxu0 0
        %1436 = vmatpush.bf16.xpose.msra.mxu0 0
        %1437 = vmatpush.bf16.xpose.msra.mxu0 %v1428
        %1438 = vmatmul.bf16.gmra.mxu0 %v1425
        %v1439 = vpop.f32.mrf.mxu0
        %v1440 = vadd.f32 0.0, %v1439
        %v1441 = vpop.f32.mrf.mxu0
        %1442 = vdwg.mxu0
        %v1444 = vsel %vm1423, %v1172, 0
        %v1447 = vsel %vm1423, %v1296, 0
        %1449 = vmatpush.bf16.xpose.msra.mxu0 0
        %1450 = vmatpush.bf16.xpose.msra.mxu0 0
        %1451 = vmatpush.bf16.xpose.msra.mxu0 0
        %1452 = vmatpush.bf16.xpose.msra.mxu0 0
        %1453 = vmatpush.bf16.xpose.msra.mxu0 0
        %1454 = vmatpush.bf16.xpose.msra.mxu0 0
        %1455 = vmatpush.bf16.xpose.msra.mxu0 0
        %1456 = vmatpush.bf16.xpose.msra.mxu0 %v1447
        %1457 = vmatmul.bf16.gmra.mxu0 %v1444
        %v1458 = vpop.f32.mrf.mxu0
        %v1459 = vadd.f32 0.0, %v1458
        %v1460 = vpop.f32.mrf.mxu0
        %1461 = vdwg.mxu0
        %v1463 = vsel %vm1423, %v1173, 0
        %v1466 = vsel %vm1423, %v1297, 0
        %1468 = vmatpush.bf16.xpose.msra.mxu0 0
        %1469 = vmatpush.bf16.xpose.msra.mxu0 0
        %1470 = vmatpush.bf16.xpose.msra.mxu0 0
        %1471 = vmatpush.bf16.xpose.msra.mxu0 0
        %1472 = vmatpush.bf16.xpose.msra.mxu0 0
        %1473 = vmatpush.bf16.xpose.msra.mxu0 0
        %1474 = vmatpush.bf16.xpose.msra.mxu0 0
        %1475 = vmatpush.bf16.xpose.msra.mxu0 %v1466
        %1476 = vmatmul.bf16.gmra.mxu0 %v1463
        %v1477 = vpop.f32.mrf.mxu0
        %v1478 = vadd.f32 0.0, %v1477
        %v1479 = vpop.f32.mrf.mxu0
        %1480 = vdwg.mxu0
        %v1482 = vsel %vm1423, %v1174, 0
        %v1485 = vsel %vm1423, %v1298, 0
        %1487 = vmatpush.bf16.xpose.msra.mxu0 0
        %1488 = vmatpush.bf16.xpose.msra.mxu0 0
        %1489 = vmatpush.bf16.xpose.msra.mxu0 0
        %1490 = vmatpush.bf16.xpose.msra.mxu0 0
        %1491 = vmatpush.bf16.xpose.msra.mxu0 0
        %1492 = vmatpush.bf16.xpose.msra.mxu0 0
        %1493 = vmatpush.bf16.xpose.msra.mxu0 0
        %1494 = vmatpush.bf16.xpose.msra.mxu0 %v1485
        %1495 = vmatmul.bf16.gmra.mxu0 %v1482
        %v1496 = vpop.f32.mrf.mxu0
        %v1497 = vadd.f32 0.0, %v1496
        %v1498 = vpop.f32.mrf.mxu0
        %1499 = vdwg.mxu0
        %v1500 = vsel %vm1423, %v1440, -inf
        %1501 = vmax.xlane.f32.xlu0 %v1500
        %v1502 = vpop.xlane.xlu0 %1501
        %v1503 = vsel %vm1423, %v1459, -inf
        %1504 = vmax.xlane.f32.xlu0 %v1503
        %v1505 = vpop.xlane.xlu0 %1504
        %v1506 = vsel %vm1423, %v1478, -inf
        %1507 = vmax.xlane.f32.xlu0 %v1506
        %v1508 = vpop.xlane.xlu0 %1507
        %v1509 = vsel %vm1423, %v1497, -inf
        %1510 = vmax.xlane.f32.xlu0 %v1509
        %v1511 = vpop.xlane.xlu0 %1510
        %v1512 = vsub.f32 %v1440, %v1502
        %v1513 = vsub.f32 %v1459, %v1505
        %v1514 = vsub.f32 %v1478, %v1508
        %v1515 = vsub.f32 %v1497, %v1511
        %v1516 = vmul.f32 %v1512, 1.442695
        %v1517 = vpow.pop %v1516
        %v1518 = vmul.f32 %v1513, 1.442695
        %v1519 = vpow.pop %v1518
        %v1520 = vmul.f32 %v1514, 1.442695
        %v1521 = vpow.pop %v1520
        %v1522 = vmul.f32 %v1515, 1.442695
        %v1523 = vpow.pop %v1522
        %v1524 = vsel %vm1423, %v1517, 0.0
        %1525 = vadd.xlane.f32.xlu0 %v1524
        %v1526 = vpop.xlane.xlu0 %1525
        %v1527 = vsel %vm1423, %v1519, 0.0
        %1528 = vadd.xlane.f32.xlu0 %v1527
        %v1529 = vpop.xlane.xlu0 %1528
        %v1530 = vsel %vm1423, %v1521, 0.0
        %1531 = vadd.xlane.f32.xlu0 %v1530
        %v1532 = vpop.xlane.xlu0 %1531
        %v1533 = vsel %vm1423, %v1523, 0.0
        %1534 = vadd.xlane.f32.xlu0 %v1533
        %v1535 = vpop.xlane.xlu0 %1534
        %v1536 = vrcp.pop %v1526
        %v1537 = vrcp.pop %v1529
        %v1538 = vrcp.pop %v1532
        %v1539 = vrcp.pop %v1535
        %v1540 = vmul.f32 %v1517, %v1536
        %v1541 = vmul.f32 %v1519, %v1537
        %v1542 = vmul.f32 %v1521, %v1538
        %v1543 = vmul.f32 %v1523, %v1539
        %v1544 = vpack.c.bf16 %v1540, %v1540
        %v1545 = vpack.c.bf16 %v1541, %v1541
        %v1546 = vpack.c.bf16 %v1542, %v1542
        %v1547 = vpack.c.bf16 %v1543, %v1543
        %v1549 = vsel %vm1423, %v1544, 0
        %vm1551 = vcmask 1043456
        %v1553 = vsel %vm1551, %v1419, 0
        %1555 = vmatpush.bf16.msra.mxu0 0
        %1556 = vmatpush.bf16.msra.mxu0 0
        %1557 = vmatpush.bf16.msra.mxu0 0
        %1558 = vmatpush.bf16.msra.mxu0 0
        %1559 = vmatpush.bf16.msra.mxu0 0
        %1560 = vmatpush.bf16.msra.mxu0 0
        %1561 = vmatpush.bf16.msra.mxu0 0
        %1562 = vmatpush.bf16.msra.mxu0 %v1553
        %1563 = vmatmul.bf16.gmra.mxu0 %v1549
        %v1564 = vpop.f32.mrf.mxu0
        %v1565 = vadd.f32 0.0, %v1564
        %v1566 = vpop.f32.mrf.mxu0
        %1567 = vdwg.mxu0
        %v1569 = vsel %vm1423, %v1545, 0
        %v1572 = vsel %vm1551, %v1420, 0
        %1574 = vmatpush.bf16.msra.mxu0 0
        %1575 = vmatpush.bf16.msra.mxu0 0
        %1576 = vmatpush.bf16.msra.mxu0 0
        %1577 = vmatpush.bf16.msra.mxu0 0
        %1578 = vmatpush.bf16.msra.mxu0 0
        %1579 = vmatpush.bf16.msra.mxu0 0
        %1580 = vmatpush.bf16.msra.mxu0 0
        %1581 = vmatpush.bf16.msra.mxu0 %v1572
        %1582 = vmatmul.bf16.gmra.mxu0 %v1569
        %v1583 = vpop.f32.mrf.mxu0
        %v1584 = vadd.f32 0.0, %v1583
        %v1585 = vpop.f32.mrf.mxu0
        %1586 = vdwg.mxu0
        %v1588 = vsel %vm1423, %v1546, 0
        %v1591 = vsel %vm1551, %v1421, 0
        %1593 = vmatpush.bf16.msra.mxu0 0
        %1594 = vmatpush.bf16.msra.mxu0 0
        %1595 = vmatpush.bf16.msra.mxu0 0
        %1596 = vmatpush.bf16.msra.mxu0 0
        %1597 = vmatpush.bf16.msra.mxu0 0
        %1598 = vmatpush.bf16.msra.mxu0 0
        %1599 = vmatpush.bf16.msra.mxu0 0
        %1600 = vmatpush.bf16.msra.mxu0 %v1591
        %1601 = vmatmul.bf16.gmra.mxu0 %v1588
        %v1602 = vpop.f32.mrf.mxu0
        %v1603 = vadd.f32 0.0, %v1602
        %v1604 = vpop.f32.mrf.mxu0
        %1605 = vdwg.mxu0
        %v1607 = vsel %vm1423, %v1547, 0
        %v1610 = vsel %vm1551, %v1422, 0
        %1612 = vmatpush.bf16.msra.mxu0 0
        %1613 = vmatpush.bf16.msra.mxu0 0
        %1614 = vmatpush.bf16.msra.mxu0 0
        %1615 = vmatpush.bf16.msra.mxu0 0
        %1616 = vmatpush.bf16.msra.mxu0 0
        %1617 = vmatpush.bf16.msra.mxu0 0
        %1618 = vmatpush.bf16.msra.mxu0 0
        %1619 = vmatpush.bf16.msra.mxu0 %v1610
        %1620 = vmatmul.bf16.gmra.mxu0 %v1607
        %v1621 = vpop.f32.mrf.mxu0
        %v1622 = vadd.f32 0.0, %v1621
        %v1623 = vpop.f32.mrf.mxu0
        %1624 = vdwg.mxu0
        %v1625 = vrot.slane %v1603, 4
        %v1626 = vsel %vm1061, %v1625, %v1565
        %v1627 = vrot.slane %v1565, 4
        %v1628 = vsel %vm1061, %v1603, %v1627
        %v1630 = vunpack.c.l.s4 1983009808
        %v1631 = vunpack.c.0.s8 %v1630
        %v1632 = vperm.slane %v1626, %v1631
        %v1634 = vunpack.c.l.s4 1983009808
        %v1635 = vunpack.c.0.s8 %v1634
        %v1636 = vperm.slane %v1628, %v1635
        %v1637 = vrot.slane %v1622, 4
        %v1638 = vsel %vm1061, %v1637, %v1584
        %v1639 = vrot.slane %v1584, 4
        %v1640 = vsel %vm1061, %v1622, %v1639
        %v1642 = vunpack.c.l.s4 1983009808
        %v1643 = vunpack.c.0.s8 %v1642
        %v1644 = vperm.slane %v1638, %v1643
        %v1646 = vunpack.c.l.s4 1983009808
        %v1647 = vunpack.c.0.s8 %v1646
        %v1648 = vperm.slane %v1640, %v1647
        %v1649 = vrot.slane %v1644, 4
        %v1650 = vsel %vm1061, %v1649, %v1632
        %v1651 = vrot.slane %v1632, 4
        %v1652 = vsel %vm1061, %v1644, %v1651
        %v1654 = vunpack.c.l.s4 1934713408
        %v1655 = vunpack.c.0.s8 %v1654
        %v1656 = vperm.slane %v1650, %v1655
        %v1658 = vunpack.c.l.s4 1934713408
        %v1659 = vunpack.c.0.s8 %v1658
        %v1660 = vperm.slane %v1652, %v1659
        %v1661 = vrot.slane %v1648, 4
        %v1662 = vsel %vm1061, %v1661, %v1636
        %v1663 = vrot.slane %v1636, 4
        %v1664 = vsel %vm1061, %v1648, %v1663
        %v1666 = vunpack.c.l.s4 1934713408
        %v1667 = vunpack.c.0.s8 %v1666
        %v1668 = vperm.slane %v1662, %v1667
        %v1670 = vunpack.c.l.s4 1934713408
        %v1671 = vunpack.c.0.s8 %v1670
        %v1672 = vperm.slane %v1664, %v1671
        %v1673 = vrot.slane %v1656, 4
        %v1674 = vsel %vm1061, 0.0, %v1673
        %v1675 = vrot.slane %v1660, 4
        %v1676 = vsel %vm1061, 0.0, %v1675
        %v1677 = vrot.slane %v1668, 4
        %v1678 = vsel %vm1061, 0.0, %v1677
        %v1679 = vrot.slane %v1672, 4
        %v1680 = vsel %vm1061, 0.0, %v1679
        %v1681 = vsel %vm1061, %v1675, %v1656
        %v1683 = vunpack.c.l.s4 1983009808
        %v1684 = vunpack.c.0.s8 %v1683
        %v1685 = vperm.slane %v1681, %v1684
        %v1686 = vrot.slane %v1676, 4
        %v1687 = vsel %vm1061, %v1686, %v1674
        %v1689 = vunpack.c.l.s4 1983009808
        %v1690 = vunpack.c.0.s8 %v1689
        %v1691 = vperm.slane %v1687, %v1690
        %v1692 = vsel %vm1061, %v1679, %v1668
        %v1694 = vunpack.c.l.s4 1983009808
        %v1695 = vunpack.c.0.s8 %v1694
        %v1696 = vperm.slane %v1692, %v1695
        %v1697 = vrot.slane %v1680, 4
        %v1698 = vsel %vm1061, %v1697, %v1678
        %v1700 = vunpack.c.l.s4 1983009808
        %v1701 = vunpack.c.0.s8 %v1700
        %v1702 = vperm.slane %v1698, %v1701
        %v1703 = vrot.slane %v1691, 4
        %v1704 = vsel %vm1061, %v1703, %v1685
        %v1705 = vrot.slane %v1685, 4
        %v1706 = vsel %vm1061, %v1691, %v1705
        %v1708 = vunpack.c.l.s4 1934713408
        %v1709 = vunpack.c.0.s8 %v1708
        %v1710 = vperm.slane %v1704, %v1709
        %v1712 = vunpack.c.l.s4 1934713408
        %v1713 = vunpack.c.0.s8 %v1712
        %v1714 = vperm.slane %v1706, %v1713
        %v1715 = vrot.slane %v1702, 4
        %v1716 = vsel %vm1061, %v1715, %v1696
        %v1717 = vrot.slane %v1696, 4
        %v1718 = vsel %vm1061, %v1702, %v1717
        %v1720 = vunpack.c.l.s4 1934713408
        %v1721 = vunpack.c.0.s8 %v1720
        %v1722 = vperm.slane %v1716, %v1721
        %v1724 = vunpack.c.l.s4 1934713408
        %v1725 = vunpack.c.0.s8 %v1724
        %v1726 = vperm.slane %v1718, %v1725
        %v1727 = vrot.slane %v1722, 4
        %v1728 = vsel %vm1061, %v1727, %v1710
        %v1729 = vrot.slane %v1710, 4
        %v1730 = vsel %vm1061, %v1722, %v1729
        %v1731 = vrot.slane %v1726, 4
        %v1732 = vsel %vm1061, %v1731, %v1714
        %v1733 = vrot.slane %v1714, 4
        %v1734 = vsel %vm1061, %v1726, %v1733
        %1736 = vrot.lane.b32.xlu0 %v1730, 8
        %v1737 = vpop.permute.xlu0 %1736
        %1740 = vrot.lane.b32.xlu0 %v1732, 16
        %v1741 = vpop.permute.xlu0 %1740
        %1744 = vrot.lane.b32.xlu0 %v1734, 24
        %v1745 = vpop.permute.xlu0 %1744
        %v1747 = vsel %vm1423, %v1728, %v1737
        %vm1748 = vcmask 130048
        %v1749 = vsel %vm1748, %v1747, %v1741
        %vm1750 = vcmask 195584
        %v1751 = vsel %vm1750, %v1749, %v1745
        %v1752 = vpack.c.bf16 %v1751, %v1751
        %v1753 = vld [vmem:[%s875] sm:$0xf]
        %v1754 = vld [vmem:[%s875 + $0x4] sm:$0xf]
        %v1755 = vld [vmem:[%s875 + $0x8] sm:$0xf]
        %v1756 = vld [vmem:[%s875 + $0xc] sm:$0xf]
        %v1757 = vld [vmem:[%s878] sm:$0x1]
        %v1759 = vperm.slane %v1757, 0
        %v1765 = vunpack.c.l.b16 %v1753
        %v1766 = vunpack.c.l.b16 %v1754
        %v1767 = vunpack.c.l.b16 %v1755
        %v1768 = vunpack.c.l.b16 %v1756
        %v1769 = vpack.c.b16 %v1766, %v1765
        %v1770 = vpack.c.b16 %v1768, %v1767
        %v1774 = vsel %vm909, %v1752, 0
        %1776 = vmatpush.bf16.msra.mxu0 0
        %1777 = vmatpush.bf16.msra.mxu0 0
        %1778 = vmatpush.bf16.msra.mxu0 0
        %1779 = vmatpush.bf16.msra.mxu0 0
        %1780 = vmatpush.bf16.msra.mxu0 0
        %1781 = vmatpush.bf16.msra.mxu0 0
        %1782 = vmatpush.bf16.msra.mxu0 %v1770
        %1783 = vmatpush.bf16.msra.mxu0 %v1769
        %1784 = vmatmul.bf16.gmra.mxu0 %v1774
        %v1785 = vpop.f32.mrf.mxu0
        %v1786 = vadd.f32 %v1759, %v1785
        %v1787 = vpop.f32.mrf.mxu0
        %1788 = vdwg.mxu0
        %v1789 = vadd.f32 %v906, %v1786
        %v1790 = vld [vmem:[%s732] sm:$0x1]
        %v1791 = vld [vmem:[%s881] sm:$0x1]
        %v1792 = vsel %vm909, %v1789, 0.0
        %1793 = vadd.xlane.f32.xlu0 %v1792
        %v1794 = vpop.xlane.xlu0 %1793
        %v1795 = vmul.f32 %v1794, %v919
        %v1796 = vsub.f32 %v1789, %v1795
        %v1797 = vmul.f32 %v1796, %v1796
        %v1798 = vsel %vm909, %v1797, 0.0
        %1799 = vadd.xlane.f32.xlu0 %v1798
        %v1800 = vpop.xlane.xlu0 %1799
        %v1801 = vmul.f32 %v1800, %v919
        %v1802 = vadd.f32 %v1801, 1e-05
        %v1803 = vrsqrt.pop %v1802
        %v1804 = vmul.f32 %v1803, %v1802
        %v1805 = vmul.f32 %v1804, %v1803
        %v1806 = vmul.f32 0.5, %v1805
        %v1807 = vsub.f32 1.5, %v1806
        %v1808 = vmul.f32 %v1803, %v1807
        %vm1809 = vweird.f32 %v1802
        %vm1810 = vweird.f32 %v1803
        %vm1811 = vmor %vm1809, %vm1810
        %v1812 = vsel %vm1811, %v1803, %v1808
        %v1813 = vmul.f32 %v1796, %v1812
        %v1815 = vperm.slane %v1790, 0
        %v1817 = vmul.f32 %v1813, %v1815
        %v1819 = vperm.slane %v1791, 0
        %v1821 = vadd.f32 %v1817, %v1819
        %v1822 = vpack.c.bf16 %v1821, %v1821
        %v1823 = vld [vmem:[%s886] sm:$0xf]
        %v1824 = vld [vmem:[%s886 + $0x4] sm:$0xf]
        %v1825 = vld [vmem:[%s886 + $0x8] sm:$0xf]
        %v1826 = vld [vmem:[%s886 + $0xc] sm:$0xf]
        %v1827 = vld [vmem:[%s889] sm:$0x1]
        %v1829 = vperm.slane %v1827, 0
        %v1835 = vunpack.c.l.b16 %v1823
        %v1836 = vunpack.c.l.b16 %v1824
        %v1837 = vunpack.c.l.b16 %v1825
        %v1838 = vunpack.c.l.b16 %v1826
        %v1839 = vpack.c.b16 %v1836, %v1835
        %v1840 = vpack.c.b16 %v1838, %v1837
        %v1844 = vsel %vm909, %v1822, 0
        %1846 = vmatpush.bf16.msra.mxu0 0
        %1847 = vmatpush.bf16.msra.mxu0 0
        %1848 = vmatpush.bf16.msra.mxu0 0
        %1849 = vmatpush.bf16.msra.mxu0 0
        %1850 = vmatpush.bf16.msra.mxu0 0
        %1851 = vmatpush.bf16.msra.mxu0 0
        %1852 = vmatpush.bf16.msra.mxu0 %v1840
        %1853 = vmatpush.bf16.msra.mxu0 %v1839
        %1854 = vmatmul.bf16.gmra.mxu0 %v1844
        %v1855 = vpop.f32.mrf.mxu0
        %v1856 = vadd.f32 %v1829, %v1855
        %v1857 = vpop.f32.mrf.mxu0
        %1858 = vdwg.mxu0
        %v1859 = vmul.f32 %v1856, 1.702
        %v1860 = vxor.u32 %v1859, 2147483648
        %v1861 = vmul.f32 %v1860, 1.442695
        %v1862 = vpow.pop %v1861
        %v1863 = vadd.f32 %v1862, 1.0
        %v1864 = vrcp.pop %v1863
        %v1865 = vmul.f32 %v1863, %v1864
        %v1866 = vsub.f32 1.0, %v1865
        %v1867 = vmul.f32 %v1864, %v1866
        %v1868 = vadd.f32 %v1864, %v1867
        %vm1869 = vweird.f32 %v1863
        %vm1870 = vweird.f32 %v1864
        %vm1871 = vmor %vm1869, %vm1870
        %v1872 = vsel %vm1871, %v1864, %v1868
        %v1873 = vand.u32 2147483647, %v1863
        %vm1874 = vcmp.eq.f32.partialorder %v1873, 8.507059e+37
        %v1875 = vand.u32 %v1863, 2147483648
        %v1876 = vor.u32 1.1754944e-38, %v1875
        %v1877 = vsel %vm1874, %v1876, %v1872
        %v1878 = vmul.f32 1.0, %v1877
        %v1879 = vmul.f32 %v1856, %v1878
        %v1880 = vpack.c.bf16 %v1879, %v1879
        %v1881 = vld [vmem:[%s894] sm:$0xf]
        %v1882 = vld [vmem:[%s894 + $0x4] sm:$0xf]
        %v1883 = vld [vmem:[%s894 + $0x8] sm:$0xf]
        %v1884 = vld [vmem:[%s894 + $0xc] sm:$0xf]
        %v1885 = vld [vmem:[%s894 + $0x10] sm:$0xf]
        %v1886 = vld [vmem:[%s894 + $0x14] sm:$0xf]
        %v1887 = vld [vmem:[%s894 + $0x18] sm:$0xf]
        %v1888 = vld [vmem:[%s894 + $0x1c] sm:$0xf]
        %v1889 = vld [vmem:[%s894 + $0x20] sm:$0xf]
        %v1890 = vld [vmem:[%s894 + $0x24] sm:$0xf]
        %v1891 = vld [vmem:[%s894 + $0x28] sm:$0xf]
        %v1892 = vld [vmem:[%s894 + $0x2c] sm:$0xf]
        %v1893 = vld [vmem:[%s894 + $0x30] sm:$0xf]
        %v1894 = vld [vmem:[%s894 + $0x34] sm:$0xf]
        %v1895 = vld [vmem:[%s894 + $0x38] sm:$0xf]
        %v1896 = vld [vmem:[%s894 + $0x3c] sm:$0xf]
        %v1897 = vld [vmem:[%s897] sm:$0x1]
        %v1899 = vperm.slane %v1897, 0
        %v1917 = vunpack.c.l.b16 %v1881
        %v1918 = vunpack.c.l.b16 %v1882
        %v1919 = vunpack.c.l.b16 %v1883
        %v1920 = vunpack.c.l.b16 %v1884
        %v1921 = vunpack.c.l.b16 %v1885
        %v1922 = vunpack.c.l.b16 %v1886
        %v1923 = vunpack.c.l.b16 %v1887
        %v1924 = vunpack.c.l.b16 %v1888
        %v1925 = vunpack.c.l.b16 %v1889
        %v1926 = vunpack.c.l.b16 %v1890
        %v1927 = vunpack.c.l.b16 %v1891
        %v1928 = vunpack.c.l.b16 %v1892
        %v1929 = vunpack.c.l.b16 %v1893
        %v1930 = vunpack.c.l.b16 %v1894
        %v1931 = vunpack.c.l.b16 %v1895
        %v1932 = vunpack.c.l.b16 %v1896
        %v1933 = vpack.c.b16 %v1918, %v1917
        %v1934 = vpack.c.b16 %v1920, %v1919
        %v1935 = vpack.c.b16 %v1922, %v1921
        %v1936 = vpack.c.b16 %v1924, %v1923
        %v1937 = vpack.c.b16 %v1926, %v1925
        %v1938 = vpack.c.b16 %v1928, %v1927
        %v1939 = vpack.c.b16 %v1930, %v1929
        %v1940 = vpack.c.b16 %v1932, %v1931
        %1949 = vmatpush.bf16.msra.mxu0 %v1940
        %1950 = vmatpush.bf16.msra.mxu0 %v1939
        %1951 = vmatpush.bf16.msra.mxu0 %v1938
        %1952 = vmatpush.bf16.msra.mxu0 %v1937
        %1953 = vmatpush.bf16.msra.mxu0 %v1936
        %1954 = vmatpush.bf16.msra.mxu0 %v1935
        %1955 = vmatpush.bf16.msra.mxu0 %v1934
        %1956 = vmatpush.bf16.msra.mxu0 %v1933
        %1957 = vmatmul.bf16.gmra.mxu0 %v1880
        %v1958 = vpop.f32.mrf.mxu0
        %v1959 = vadd.f32 %v1899, %v1958
        %v1960 = vpop.f32.mrf.mxu0
        %1961 = vdwg.mxu0
        %v1962 = vadd.f32 %v1789, %v1959
        %1963 = vst.msk [vmem:[#allocation2] sm:$0xff] %vm909, %v1962
        %p1964 = scmp.eq.s32.totalorder %s45, 1
        // Predicated region
        $region109: #{tpu_custom_call.1} parent=87 // pred_check
          %p1965 = pneg %p1964
        $region110: #{tpu_custom_call.1} parent=87 // pred_check_branch
          %1967 = sbr.rel (%p1965) target = $region112
        $region111: #{tpu_custom_call.1} parent=87 // pred_region
          %1968 = vst.msk [vmem:[%s846] sm:$0xff] %vm909, %v1962
        $region112: #{tpu_custom_call.1} parent=87 // pred_fallthru
          _
        %s1969 = sand.u32 %s502, 1
        %s1970 = scalar_lea.sflag [#allocation5], %s1969
        %s1971 = sand.u32 %s502, 1
        %s1972 = smul.addr %s1971, 8
        %s1973 = scalar_lea.vmem [#allocation11], %s1972
        // Predicated region
        $region113: #{tpu_custom_call.1} parent=87 // pred_check
          %p1974 = pneg %p512
        $region114: #{tpu_custom_call.1} parent=87 // pred_check_branch
          %1976 = sbr.rel (%p1974) target = $region116
        $region115: #{tpu_custom_call.1} parent=87 // pred_region
          %1978 = vsyncadd %s1970, 0
          %s1979 = smul.addr %s44, 8
          %s1980 = scalar_lea.hbm %s17, %s1979
          %s1982 = sshll.u32 %s1973, 4
          %s1983 = int_to_ptr.vmem [resolvable:$true] %s1982
          %s1984 = sshll.u32 %s1980, 4
          %s1985 = int_to_ptr.hbm [resolvable:$true] %s1984
          %1987 = dma.vmem_to_hbm [thread:$0]  %s1983, 128, %s1985, %s1970
        $region116: #{tpu_custom_call.1} parent=87 // pred_fallthru
          _
      $region88: #{tpu_custom_call.1} parent=5 // pred_fallthru
        _
      %p1988 = scmp.le.s32.totalorder 2, %s35
      // Predicated region
      $region117: #{tpu_custom_call.1} parent=5 // pred_check
        %p1989 = pneg %p1988
      $region118: #{tpu_custom_call.1} parent=5 // pred_check_branch
        %1991 = sbr.rel (%p1989) target = $region120
      $region119: #{tpu_custom_call.1} parent=5 // pred_region
        %s1992 = ssub.s32 %s35, 2
        // Predicated region
        $region121: #{tpu_custom_call.1} parent=119 // pred_check
          %p1993 = pneg %p518
        $region122: #{tpu_custom_call.1} parent=119 // pred_check_branch
          %1995 = sbr.rel (%p1993) target = $region124
        $region123: #{tpu_custom_call.1} parent=119 // pred_region
          %s1996 = sand.u32 %s503, 1
          %s1997 = scalar_lea.sflag [#allocation5], %s1996
          %s1998 = sand.u32 %s503, 1
          %s1999 = smul.addr %s1998, 8
          %s2000 = scalar_lea.vmem [#allocation11], %s1999
          %2002 = dma.done %s1997, 128
        $region124: #{tpu_custom_call.1} parent=119 // pred_fallthru
          _
      $region120: #{tpu_custom_call.1} parent=5 // pred_fallthru
        _
    $region6: #{tpu_custom_call.1} parent=1 // loop_footer
      %s39 = sadd.s32 1, %s35
    $region7: #{tpu_custom_call.1} parent=1 // loop_footer_branch
      %34 = sbr.rel target = $region3
    $region8: #{tpu_custom_call.1} parent=1 // loop_exit
      _
    %2003 = vsyncpa [#allocation4], 1
    %s2004 = scalar_lea.sflag [#allocation4], 1
    %2005 = vsyncpa %s2004, 1
    %2006 = vsyncpa [#allocation7], 1
    %s2007 = scalar_lea.sflag [#allocation7], 1
    %2008 = vsyncpa %s2007, 1
    %2009 = vsyncpa [#allocation10], 1
    %s2010 = scalar_lea.sflag [#allocation10], 1
    %2011 = vsyncpa %s2010, 1
    %2012 = vsyncpa [#allocation5], 1
    %s2013 = scalar_lea.sflag [#allocation5], 1
    %2014 = vsyncpa %s2013, 1

</llo_original>
